<compile_context>
chip_gen: v7x
topology: tpu7x:2x2x1
jax: 0.10.0
libtpu: 0.0.40
codegen_flags: <defaults>
</compile_context>

<pallas_src>
import functools
import math

import jax
import jax.numpy as jnp
from jax.experimental import pallas as pl
from jax.experimental.pallas import tpu as pltpu


GROWTH = 32
BLOCK_CONFIG = (6, 12, 48, 32)   # DenseNet-201
NUM_INIT = 64
BN_SIZE = 4


def _round_up(x, m):
    return (x + m - 1) // m * m


def _pick_tile(dim, candidates=(512, 384, 256, 128)):
    for c in candidates:
        if dim % c == 0:
            return c
    return 128


# ---------------------------------------------------------------------------
# Fused matmul kernel:  out = post( pre(A * ps + pb) @ B ) * qs + qb
#   pre  : per-K (input-channel) scale/bias (+ReLU)  -> DenseNet pre-activation BN
#   post : per-N (output-channel) scale/bias (+ReLU) -> folded BN of the consumer
# A blocks are f32 (cast to bf16 after the prologue), B is pre-padded bf16,
# accumulation is f32 in the resident output block (constant (i, j) across k).
# ---------------------------------------------------------------------------
def _make_mm_kernel(pre_relu, post_relu):
    def kernel(a_ref, b_ref, ps_ref, pb_ref, qs_ref, qb_ref, o_ref):
        k = pl.program_id(2)

        @pl.when(k == 0)
        def _():
            o_ref[...] = jnp.zeros_like(o_ref)

        a = a_ref[...] * ps_ref[...] + pb_ref[...]
        if pre_relu:
            a = jnp.maximum(a, 0.0)
        o_ref[...] += jnp.dot(
            a.astype(jnp.bfloat16), b_ref[...], preferred_element_type=jnp.float32
        )

        @pl.when(k == pl.num_programs(2) - 1)
        def _():
            out = o_ref[...] * qs_ref[...] + qb_ref[...]
            if post_relu:
                out = jnp.maximum(out, 0.0)
            o_ref[...] = out

    return kernel


_MM_KERNELS = {
    (pre, post): _make_mm_kernel(pre, post)
    for pre in (False, True)
    for post in (False, True)
}


@functools.partial(jax.jit, static_argnames=("n_out", "pre_relu", "post_relu"))
def fused_matmul(a, b, ps, pb, qs, qb, *, n_out, pre_relu, post_relu):
    """a: (M, Kp) f32, b: (Kp, Np) bf16 pre-padded, ps/pb: (1, Kp), qs/qb: (1, Np)."""
    M, Kp = a.shape
    Kp2, Np = b.shape
    assert Kp == Kp2, (Kp, Kp2)
    TM = 256 if M >= 256 else _round_up(M, 8)          # M is tiled (fits VMEM on v7x too)
    Mp = _round_up(M, TM)
    TK = _pick_tile(Kp)                                # large K steps amortize per-step cost
    TN = _pick_tile(Np, (256, 128))
    a_p = a if Mp == M else jnp.pad(a, ((0, Mp - M), (0, 0)))

    out = pl.pallas_call(
        _MM_KERNELS[(pre_relu, post_relu)],
        out_shape=jax.ShapeDtypeStruct((Mp, Np), jnp.float32),
        grid_spec=pltpu.PrefetchScalarGridSpec(
            num_scalar_prefetch=0,
            grid=(Mp // TM, Np // TN, Kp // TK),       # K innermost (reduction)
            in_specs=[
                pl.BlockSpec((TM, TK), lambda i, j, k: (i, k)),
                pl.BlockSpec((TK, TN), lambda i, j, k: (k, j)),
                pl.BlockSpec((1, TK), lambda i, j, k: (0, k)),
                pl.BlockSpec((1, TK), lambda i, j, k: (0, k)),
                pl.BlockSpec((1, TN), lambda i, j, k: (0, j)),
                pl.BlockSpec((1, TN), lambda i, j, k: (0, j)),
            ],
            out_specs=pl.BlockSpec((TM, TN), lambda i, j, k: (i, j)),
        ),
        compiler_params=pltpu.CompilerParams(
            dimension_semantics=("parallel", "parallel", "arbitrary")
        ),
    )(a_p, b, ps, pb, qs, qb)
    return out[:M, :n_out]


# ---------------------------------------------------------------------------
# Row-tiled stacked reduce kernels (max-pool / avg-pool)
# ---------------------------------------------------------------------------
def _max_reduce_kernel(p_ref, o_ref):
    o_ref[...] = jnp.max(p_ref[...], axis=0)


def _mean_reduce_kernel(p_ref, o_ref):
    r = p_ref.shape[0]
    o_ref[...] = jnp.sum(p_ref[...], axis=0) * (1.0 / r)


def _stacked_reduce(p, op):
    """p: (R, M, C) -> (M, C) reduced over axis 0, tiled over rows."""
    R, M, C = p.shape
    TM = 512 if M >= 512 else _round_up(M, 8)
    Mp = _round_up(M, TM)
    if Mp != M:
        p = jnp.pad(p, ((0, 0), (0, Mp - M), (0, 0)))
    kernel = _max_reduce_kernel if op == "max" else _mean_reduce_kernel
    out = pl.pallas_call(
        kernel,
        out_shape=jax.ShapeDtypeStruct((Mp, C), p.dtype),
        grid=(Mp // TM,),
        in_specs=[pl.BlockSpec((R, TM, C), lambda i: (0, i, 0))],
        out_specs=pl.BlockSpec((TM, C), lambda i: (i, 0)),
        compiler_params=pltpu.CompilerParams(dimension_semantics=("parallel",)),
    )(p)
    return out[:M]


@jax.jit
def maxpool_3x3_s2_p1(x):  # NHWC
    N, H, W, C = x.shape
    Ho = (H + 2 - 3) // 2 + 1
    Wo = (W + 2 - 3) // 2 + 1
    xp = jnp.pad(x, ((0, 0), (1, 1), (1, 1), (0, 0)), constant_values=-jnp.inf)
    patches = [
        xp[:, i : i + 2 * Ho : 2, j : j + 2 * Wo : 2, :]
        for i in range(3)
        for j in range(3)
    ]
    p = jnp.stack(patches, axis=0).reshape(9, N * Ho * Wo, C)
    return _stacked_reduce(p, "max").reshape(N, Ho, Wo, C)


@jax.jit
def avgpool_2x2_s2(x):  # NHWC, even H/W
    N, H, W, C = x.shape
    Ho, Wo = H // 2, W // 2
    patches = [x[:, i::2, j::2, :] for i in range(2) for j in range(2)]
    p = jnp.stack(patches, axis=0).reshape(4, N * Ho * Wo, C)
    return _stacked_reduce(p, "mean").reshape(N, Ho, Wo, C)


@jax.jit
def _im2col_3x3_s1_p1(x):  # NHWC -> (N*H*W, 9*C)
    N, H, W, C = x.shape
    xp = jnp.pad(x, ((0, 0), (1, 1), (1, 1), (0, 0)))
    patches = [xp[:, i : i + H, j : j + W, :] for i in range(3) for j in range(3)]
    return jnp.concatenate(patches, axis=-1).reshape(N * H * W, 9 * C)


# ---------------------------------------------------------------------------
# Conv application (im2col glue + fused Pallas matmul)
# ---------------------------------------------------------------------------
def conv2d(x, cp, *, stride, pad, pre_relu, post_relu):
    N, H, W, C = x.shape
    kh, kw = cp["kh"], cp["kw"]
    Ho = (H + 2 * pad - kh) // stride + 1
    Wo = (W + 2 * pad - kw) // stride + 1
    if kh == 1 and kw == 1 and stride == 1 and pad == 0:
        cols = x.reshape(N * H * W, C)
    elif kh == 3 and kw == 3 and stride == 1 and pad == 1:
        cols = _im2col_3x3_s1_p1(x)
    else:
        # TODO(synk): generic im2col still materializes kh*kw shifted copies in HBM;
        # a fully fused version would walk the (kh, kw) offsets as extra K grid steps
        # inside the matmul kernel.  Only the single 7x7 stem conv takes this path.
        xp = jnp.pad(x, ((0, 0), (pad, pad), (pad, pad), (0, 0))) if pad else x
        patches = [
            xp[:, i : i + stride * Ho : stride, j : j + stride * Wo : stride, :]
            for i in range(kh)
            for j in range(kw)
        ]
        cols = jnp.concatenate(patches, axis=-1).reshape(N * Ho * Wo, kh * kw * C)
    Kp = cp["w"].shape[0]
    if cols.shape[1] != Kp:
        cols = jnp.pad(cols, ((0, 0), (0, Kp - cols.shape[1])))
    out = fused_matmul(
        cols, cp["w"], cp["ps"], cp["pb"], cp["qs"], cp["qb"],
        n_out=cp["cout"], pre_relu=pre_relu, post_relu=post_relu,
    )
    return out.reshape(N, Ho, Wo, cp["cout"])


def linear(a, lp, *, pre_relu, post_relu):
    Kp = lp["w"].shape[0]
    if a.shape[1] != Kp:
        a = jnp.pad(a, ((0, 0), (0, Kp - a.shape[1])))
    return fused_matmul(
        a, lp["w"], lp["ps"], lp["pb"], lp["qs"], lp["qb"],
        n_out=lp["n_out"], pre_relu=pre_relu, post_relu=post_relu,
    )


# ---------------------------------------------------------------------------
# Parameter construction: weights are reshaped / padded / cast to bf16 ONCE here.
# ---------------------------------------------------------------------------
def _prep_vec(v, padded_len, reps=1):
    if reps > 1:
        v = jnp.tile(v, reps)
    n = v.shape[0]
    if padded_len != n:
        v = jnp.pad(v, (0, padded_len - n))
    return v.reshape(1, padded_len).astype(jnp.float32)


def _prep_conv(w, bn_pre=None, bn_post=None):
    """w: (Cout, Cin, kh, kw) torch layout; bn_* are folded (scale, shift)."""
    cout, cin, kh, kw = w.shape
    K = kh * kw * cin
    Kp = _round_up(K, 128)
    Np = _round_up(cout, 128)
    wm = jnp.transpose(w, (2, 3, 1, 0)).reshape(K, cout)
    wm = jnp.pad(wm, ((0, Kp - K), (0, Np - cout))).astype(jnp.bfloat16)
    ps_raw, pb_raw = bn_pre if bn_pre is not None else (
        jnp.ones((cin,), jnp.float32), jnp.zeros((cin,), jnp.float32))
    qs_raw, qb_raw = bn_post if bn_post is not None else (
        jnp.ones((cout,), jnp.float32), jnp.zeros((cout,), jnp.float32))
    return dict(
        w=wm, kh=kh, kw=kw, cout=cout,
        ps=_prep_vec(ps_raw, Kp, kh * kw), pb=_prep_vec(pb_raw, Kp, kh * kw),
        qs=_prep_vec(qs_raw, Np), qb=_prep_vec(qb_raw, Np),
    )


def _prep_linear(w, b, bn_pre=None):
    """w: (out, in) torch layout, b: (out,)."""
    out_f, in_f = w.shape
    Kp = _round_up(in_f, 128)
    Np = _round_up(out_f, 128)
    wm = jnp.pad(w.T, ((0, Kp - in_f), (0, Np - out_f))).astype(jnp.bfloat16)
    ps_raw, pb_raw = bn_pre if bn_pre is not None else (
        jnp.ones((in_f,), jnp.float32), jnp.zeros((in_f,), jnp.float32))
    return dict(
        w=wm, n_out=out_f,
        ps=_prep_vec(ps_raw, Kp), pb=_prep_vec(pb_raw, Kp),
        qs=_prep_vec(jnp.ones((out_f,), jnp.float32), Np),
        qb=_prep_vec(b, Np),
    )


def build_params(key):
    cnt = [0]

    def nk():
        cnt[0] += 1
        return jax.random.fold_in(key, cnt[0])

    def conv_w(cout, cin, kh, kw):
        fan_in = cin * kh * kw
        return jax.random.normal(nk(), (cout, cin, kh, kw), jnp.float32) * math.sqrt(
            2.0 / fan_in
        )

    def bn(c, eps=1e-5):
        g = 1.0 + 0.1 * jax.random.normal(nk(), (c,), jnp.float32)
        beta = 0.05 * jax.random.normal(nk(), (c,), jnp.float32)
        mean = 0.05 * jax.random.normal(nk(), (c,), jnp.float32)
        var = 1.0 + 0.1 * jnp.abs(jax.random.normal(nk(), (c,), jnp.float32))
        s = g / jnp.sqrt(var + eps)      # inference-mode BN folded to scale/shift
        return s, beta - mean * s

    params = {}
    # stem: conv0 (7x7/2 pad 3, no bias) with norm0+ReLU fused into its epilogue.
    params["stem"] = _prep_conv(conv_w(NUM_INIT, 3, 7, 7), bn_post=bn(NUM_INIT))

    blocks, transitions = [], []
    ch = NUM_INIT
    for bi, nlayers in enumerate(BLOCK_CONFIG):
        layers = []
        for li in range(nlayers):
            cin = ch + li * GROWTH
            width = BN_SIZE * GROWTH  # 128
            # conv1 (1x1): pre = this layer's norm1+ReLU on the concat input,
            #              post = this layer's norm2+ReLU, so the 3x3 conv sees an
            #              already-normalized input (keeps its zero-padding exact).
            conv1 = _prep_conv(conv_w(width, cin, 1, 1), bn_pre=bn(cin), bn_post=bn(width))
            conv2 = _prep_conv(conv_w(GROWTH, width, 3, 3))
            layers.append({"conv1": conv1, "conv2": conv2})
        ch += nlayers * GROWTH
        blocks.append(layers)
        if bi < len(BLOCK_CONFIG) - 1:
            cout = ch // 2
            transitions.append(_prep_conv(conv_w(cout, ch, 1, 1), bn_pre=bn(ch)))
            ch = cout
    params["blocks"] = blocks
    params["transitions"] = transitions

    # norm5 (last op of `features`; the sliced Sequential has no ReLU after it) is
    # folded into the first Linear's pre-activation scale/bias.
    norm5 = bn(ch)  # ch == 1920
    fc1_w = jax.random.normal(nk(), (256, ch), jnp.float32) * math.sqrt(1.0 / ch)
    fc1_b = 0.01 * jax.random.normal(nk(), (256,), jnp.float32)
    fc2_w = jax.random.normal(nk(), (5, 256), jnp.float32) * math.sqrt(1.0 / 256)
    fc2_b = 0.01 * jax.random.normal(nk(), (5,), jnp.float32)
    params["fc1"] = _prep_linear(fc1_w, fc1_b, bn_pre=norm5)
    params["fc2"] = _prep_linear(fc2_w, fc2_b)
    return params


# ---------------------------------------------------------------------------
# Forward pass (matches Densenet201.forward semantics)
# ---------------------------------------------------------------------------
def densenet201_forward(params, x_nchw):
    x = jnp.transpose(x_nchw, (0, 2, 3, 1)).astype(jnp.float32)  # NCHW -> NHWC

    # features: conv0 -> norm0 -> relu0 -> pool0
    x = conv2d(x, params["stem"], stride=2, pad=3, pre_relu=False, post_relu=True)
    x = maxpool_3x3_s2_p1(x)

    for bi, block in enumerate(params["blocks"]):
        for layer in block:
            # dense layer: norm1->relu->conv1x1->norm2->relu->conv3x3(pad 1), concat
            y = conv2d(x, layer["conv1"], stride=1, pad=0, pre_relu=True, post_relu=True)
            y = conv2d(y, layer["conv2"], stride=1, pad=1, pre_relu=False, post_relu=False)
            x = jnp.concatenate([x, y], axis=-1)
        if bi < len(params["transitions"]):
            # transition: norm->relu->conv1x1->avgpool 2x2/2
            x = conv2d(x, params["transitions"][bi], stride=1, pad=0,
                       pre_relu=True, post_relu=False)
            x = avgpool_2x2_s2(x)

    # Flatten (features end at 1x1 spatial for 32x32 inputs, as Linear(1920,..) requires)
    # -> Linear(1920,256) with norm5 folded as pre-scale -> ReLU -> Linear(256,5)
    n = x.shape[0]
    feat = x.reshape(n, -1)
    h = linear(feat, params["fc1"], pre_relu=False, post_relu=True)
    logits = linear(h, params["fc2"], pre_relu=False, post_relu=False)
    return logits  # (N, 5)


if __name__ == "__main__":
    key = jax.random.PRNGKey(0)
    params = build_params(key)
    # 3-channel image batch; 32x32 so `features` ends at 1x1 spatial, which the
    # module's Flatten + Linear(1920, 256) requires.
    x = jax.random.normal(jax.random.fold_in(key, 12345), (2, 3, 32, 32), jnp.float32)

    out = densenet201_forward(params, x)
    out = jax.block_until_ready(out)

    assert out.shape == (2, 5), out.shape
    assert bool(jnp.all(jnp.isfinite(out)))
    print("KERNEL_OK")
</pallas_src>

<mosaic_0001>
module attributes {stable_mosaic.version = 11 : i64} {
  func.func @kernel(%arg0: i32, %arg1: i32, %arg2: i32, %arg3: memref<256x256xf32, #tpu.memory_space<vmem>>, %arg4: memref<256x128xbf16, #tpu.memory_space<vmem>>, %arg5: memref<1x256xf32, #tpu.memory_space<vmem>>, %arg6: memref<1x256xf32, #tpu.memory_space<vmem>>, %arg7: memref<1x128xf32, #tpu.memory_space<vmem>>, %arg8: memref<1x128xf32, #tpu.memory_space<vmem>>, %arg9: memref<256x128xf32, #tpu.memory_space<vmem>>) attributes {dimension_semantics = [#tpu.dimension_semantics<parallel>, #tpu.dimension_semantics<parallel>, #tpu.dimension_semantics<arbitrary>], iteration_bounds = array<i64: 2, 1, 1>, scalar_prefetch = 0 : i64, scratch_operands = 0 : i64, tpu.core_type = #tpu.core_type<tc>, window_params = [{transform_indices = @transform_0, window_bounds = array<i64: 256, 256>}, {transform_indices = @transform_1, window_bounds = array<i64: 256, 128>}, {transform_indices = @transform_2, window_bounds = array<i64: 1, 256>}, {transform_indices = @transform_3, window_bounds = array<i64: 1, 256>}, {transform_indices = @transform_4, window_bounds = array<i64: 1, 128>}, {transform_indices = @transform_5, window_bounds = array<i64: 1, 128>}, {transform_indices = @transform_6, window_bounds = array<i64: 256, 128>}]} {
    %c0_i32 = arith.constant 0 : i32
    %0 = arith.cmpi eq, %arg2, %c0_i32 : i32
    %1 = arith.extui %0 : i1 to i32
    %c0_i32_0 = arith.constant 0 : i32
    %2 = arith.cmpi ne, %1, %c0_i32_0 : i32
    scf.if %2 {
      %cst_14 = arith.constant 0.000000e+00 : f32
      %19 = vector.broadcast %cst_14 : f32 to vector<256x128xf32>
      %c0_15 = arith.constant 0 : index
      %c0_16 = arith.constant 0 : index
      %20 = vector.load %arg9[%c0_15, %c0_16] : memref<256x128xf32, #tpu.memory_space<vmem>>, vector<256x128xf32>
      tpu.vector_store %arg9[%c0_15, %c0_16], %19 {strides = array<i32>} : memref<256x128xf32, #tpu.memory_space<vmem>>, vector<256x128xf32>,
    } else {
    }
    %c0 = arith.constant 0 : index
    %c0_1 = arith.constant 0 : index
    %3 = vector.load %arg3[%c0, %c0_1] : memref<256x256xf32, #tpu.memory_space<vmem>>, vector<256x256xf32>
    %c0_2 = arith.constant 0 : index
    %c0_3 = arith.constant 0 : index
    %4 = vector.load %arg5[%c0_2, %c0_3] : memref<1x256xf32, #tpu.memory_space<vmem>>, vector<1x256xf32>
    %5 = vector.broadcast %4 : vector<1x256xf32> to vector<256x256xf32>
    %6 = arith.mulf %3, %5 : vector<256x256xf32>
    %c0_4 = arith.constant 0 : index
    %c0_5 = arith.constant 0 : index
    %7 = vector.load %arg6[%c0_4, %c0_5] : memref<1x256xf32, #tpu.memory_space<vmem>>, vector<1x256xf32>
    %8 = vector.broadcast %7 : vector<1x256xf32> to vector<256x256xf32>
    %9 = arith.addf %6, %8 : vector<256x256xf32>
    %c0_6 = arith.constant 0 : index
    %c0_7 = arith.constant 0 : index
    %10 = vector.load %arg9[%c0_6, %c0_7] : memref<256x128xf32, #tpu.memory_space<vmem>>, vector<256x128xf32>
    %11 = arith.truncf %9 : vector<256x256xf32> to vector<256x256xbf16>
    %c0_8 = arith.constant 0 : index
    %c0_9 = arith.constant 0 : index
    %12 = vector.load %arg4[%c0_8, %c0_9] : memref<256x128xbf16, #tpu.memory_space<vmem>>, vector<256x128xbf16>
    %cst = arith.constant dense<0.000000e+00> : vector<256x128xf32>
    %13 = tpu.matmul %11, %12, %cst {dimension_numbers = #tpu.dot_dimension_numbers<[1], [0], [0], [1], [0, 0, 1, 1], [], []>} : vector<256x256xbf16>, vector<256x128xbf16>, vector<256x128xf32> -> vector<256x128xf32>
    %14 = arith.addf %10, %13 : vector<256x128xf32>
    %c0_10 = arith.constant 0 : index
    %c0_11 = arith.constant 0 : index
    %15 = vector.load %arg9[%c0_10, %c0_11] : memref<256x128xf32, #tpu.memory_space<vmem>>, vector<256x128xf32>
    tpu.vector_store %arg9[%c0_10, %c0_11], %14 {strides = array<i32>} : memref<256x128xf32, #tpu.memory_space<vmem>>, vector<256x128xf32>,
    %c0_i32_12 = arith.constant 0 : i32
    %16 = arith.cmpi eq, %arg2, %c0_i32_12 : i32
    %17 = arith.extui %16 : i1 to i32
    %c0_i32_13 = arith.constant 0 : i32
    %18 = arith.cmpi ne, %17, %c0_i32_13 : i32
    scf.if %18 {
      %c0_14 = arith.constant 0 : index
      %c0_15 = arith.constant 0 : index
      %19 = vector.load %arg9[%c0_14, %c0_15] : memref<256x128xf32, #tpu.memory_space<vmem>>, vector<256x128xf32>
      %c0_16 = arith.constant 0 : index
      %c0_17 = arith.constant 0 : index
      %20 = vector.load %arg7[%c0_16, %c0_17] : memref<1x128xf32, #tpu.memory_space<vmem>>, vector<1x128xf32>
      %21 = vector.broadcast %20 : vector<1x128xf32> to vector<256x128xf32>
      %22 = arith.mulf %19, %21 : vector<256x128xf32>
      %c0_18 = arith.constant 0 : index
      %c0_19 = arith.constant 0 : index
      %23 = vector.load %arg8[%c0_18, %c0_19] : memref<1x128xf32, #tpu.memory_space<vmem>>, vector<1x128xf32>
      %24 = vector.broadcast %23 : vector<1x128xf32> to vector<256x128xf32>
      %25 = arith.addf %22, %24 : vector<256x128xf32>
      %cst_20 = arith.constant 0.000000e+00 : f32
      %26 = vector.broadcast %cst_20 : f32 to vector<256x128xf32>
      %27 = arith.maximumf %25, %26 : vector<256x128xf32>
      %c0_21 = arith.constant 0 : index
      %c0_22 = arith.constant 0 : index
      %28 = vector.load %arg9[%c0_21, %c0_22] : memref<256x128xf32, #tpu.memory_space<vmem>>, vector<256x128xf32>
      tpu.vector_store %arg9[%c0_21, %c0_22], %27 {strides = array<i32>} : memref<256x128xf32, #tpu.memory_space<vmem>>, vector<256x128xf32>,
    } else {
    }
    return
  }
  func.func @transform_0(%arg0: i32, %arg1: i32, %arg2: i32) -> (i32, i32) {
    %c0_i32 = arith.constant 0 : i32
    return %arg0, %arg2 : i32, i32
  }
  func.func @transform_1(%arg0: i32, %arg1: i32, %arg2: i32) -> (i32, i32) {
    %c0_i32 = arith.constant 0 : i32
    return %arg2, %arg1 : i32, i32
  }
  func.func @transform_2(%arg0: i32, %arg1: i32, %arg2: i32) -> (i32, i32) {
    %c0_i32 = arith.constant 0 : i32
    %c0_i32_0 = arith.constant 0 : i32
    return %c0_i32, %arg2 : i32, i32
  }
  func.func @transform_3(%arg0: i32, %arg1: i32, %arg2: i32) -> (i32, i32) {
    %c0_i32 = arith.constant 0 : i32
    %c0_i32_0 = arith.constant 0 : i32
    return %c0_i32, %arg2 : i32, i32
  }
  func.func @transform_4(%arg0: i32, %arg1: i32, %arg2: i32) -> (i32, i32) {
    %c0_i32 = arith.constant 0 : i32
    %c0_i32_0 = arith.constant 0 : i32
    return %c0_i32, %arg1 : i32, i32
  }
  func.func @transform_5(%arg0: i32, %arg1: i32, %arg2: i32) -> (i32, i32) {
    %c0_i32 = arith.constant 0 : i32
    %c0_i32_0 = arith.constant 0 : i32
    return %c0_i32, %arg1 : i32, i32
  }
  func.func @transform_6(%arg0: i32, %arg1: i32, %arg2: i32) -> (i32, i32) {
    %c0_i32 = arith.constant 0 : i32
    return %arg0, %arg1 : i32, i32
  }
}

</mosaic_0001>

<llo_original>
// kernel: fused_matmul.1
$region0: #{fused_matmul.1}
  #allocation0 [shape = 'u32[]', space=smem, size = 0x4, offset = 0x4, fixed_abs, tag = 'smem constant byte address 0x4 - core index']
  #allocation1 [shape = 'u32[144,128]{1,0:T(1,128)}', space=vmem, size = 0x12000, scoped, tag = 'internal scratch']
  %s0 = inlined_call_operand.hbm [shape: f32[512,256], index: 0, kind: input, shape index: {}]
  %s1 = inlined_call_operand.hbm [shape: bf16[256,128], index: 1, kind: input, shape index: {}]
  %s2 = inlined_call_operand.vmem [shape: f32[1,256], index: 2, kind: input, shape index: {}]
  %s3 = inlined_call_operand.vmem [shape: f32[1,256], index: 3, kind: input, shape index: {}]
  %s4 = inlined_call_operand.vmem [shape: f32[1,128], index: 4, kind: input, shape index: {}]
  %s5 = inlined_call_operand.vmem [shape: f32[1,128], index: 5, kind: input, shape index: {}]
  %s6 = inlined_call_operand.vmem [shape: f32[512,128], index: 6, kind: output, shape index: {}]
  %s7 = sld [smem:[#allocation0]]
  $region73: #{fused_matmul.1} parent=0
    _
  %s9 = ssub.s32 1, %s7
  %s10 = scalar_select 0, %s9, %s7
  $region1: #{fused_matmul.1} parent=0
    #allocation2 [shape = 'u8[524288]{0}', space=vmem, size = 0x80000, scoped, tag = 'input window, operand 0']
    #allocation3 [shape = 's32[2]{0}', space=sflag, size = 0x8, scoped, tag = 'scoped memory for fused_matmul.1']
    #allocation4 [shape = 'u8[65536]{0}', space=vmem, size = 0x10000, scoped, tag = 'input window, operand 1, single buffered']
    #allocation5 [shape = 's32[1]{0}', space=sflag, size = 0x4, scoped, tag = 'scoped memory for fused_matmul.1']
    %11 = vsyncpa [#allocation3], 0
    %s12 = scalar_lea.sflag [#allocation3], 1
    %13 = vsyncpa %s12, 0
    %14 = vsyncpa [#allocation5], 0
    loop: start=0, step=1, limit=4
    $region2: #{fused_matmul.1} parent=1 // loop_pre_header
      _
    $region3: #{fused_matmul.1} parent=1 // loop_header
      %s16 = sphi 0, %s20
      %p17 = scmp.ge.s32.totalorder %s16, 4
      %s23 = sphi 0, %s42
      %s24 = sphi 0, %s38
      %s25 = sphi 0, %s34
      %s26 = sphi 0, %s23
      %s27 = sphi 0, %s24
      %s28 = sphi 0, %s25
      %s29 = sphi 0, %s26
      %s30 = sphi 0, %s27
      %s31 = sphi 0, %s28
      %s47 = sphi 0, %s49
      %s50 = sphi 0, %s47
      %s51 = sphi 0, %s50
      %s67 = sphi 0, %s51
      %s75 = sphi 0, %s77
      %s78 = sphi 0, %s75
      %s79 = sphi 0, %s78
      %s95 = sphi 0, %s79
      %s101 = sphi 0, %s103
      %s104 = sphi 0, %s101
      %s105 = sphi 0, %s104
      %s121 = sphi 0, %s105
      %s127 = sphi 0, %s129
      %s130 = sphi 0, %s127
      %s131 = sphi 0, %s130
      %s147 = sphi 0, %s131
      %s153 = sphi 0, %s155
      %s156 = sphi 0, %s153
      %s157 = sphi 0, %s156
      %s173 = sphi 0, %s157
      %s179 = sphi 0, %s181
      %s182 = sphi 0, %s179
      %s183 = sphi 0, %s182
      %s199 = sphi 0, %s183
      %s207 = sphi 0, %s209
      %s210 = sphi 0, %s207
      %s211 = sphi 0, %s210
      %s227 = sphi 0, %s211
    $region4: #{fused_matmul.1} parent=1 // loop_header_branch
      %19 = sbr.rel (%p17) target = $region8
    $region5: #{fused_matmul.1} parent=1 // loop_body
      %s21 = ssub.s32 %s16, 1
      %s22 = ssub.s32 %s16, 2
      %s32 = sadd.s32 1, %s25
      %p33 = scmp.ge.s32.totalorder %s32, 1
      %s34 = scalar_select %p33, 0, %s32
      %s35 = sadd.s32 1, %s24
      %s36 = scalar_select %p33, %s35, %s24
      %p37 = scmp.ge.s32.totalorder %s36, 1
      %s38 = scalar_select %p37, 0, %s36
      %s39 = sadd.s32 1, %s23
      %s40 = scalar_select %p37, %s39, %s23
      %p41 = scmp.ge.s32.totalorder %s40, 2
      %s42 = scalar_select %p41, 0, %s40
      %s43 = ssub.s32 %s23, %s42
      %s44 = ssub.s32 %s25, %s34
      %s45 = sor.u32 %s43, %s44
      %p46 = scmp.eq.s32.totalorder %s45, 0
      %s48 = sadd.s32 %s47, 1
      %s49 = scalar_select %p46, %s47, %s48
      %p52 = pneg %p46
      %p53 = scmp.eq.s32.totalorder %s16, 1
      %p54 = por %p52, %p53
      %p55 = scmp.ne.s32.totalorder %s47, %s50
      %p56 = scmp.eq.s32.totalorder %s16, 0
      %p57 = por %p55, %p56
      %p58 = scmp.ne.s32.totalorder %s47, %s50
      %p59 = scmp.eq.s32.totalorder %s21, 1
      %p60 = por %p58, %p59
      %p61 = scmp.ne.s32.totalorder %s50, %s51
      %p62 = scmp.eq.s32.totalorder %s21, 0
      %p63 = por %p61, %p62
      %p64 = scmp.ne.s32.totalorder %s50, %s51
      %p65 = scmp.eq.s32.totalorder %s22, 1
      %p66 = por %p64, %p65
      %p68 = scmp.ne.s32.totalorder %s51, %s67
      %p69 = scmp.eq.s32.totalorder %s22, 0
      %p70 = por %p68, %p69
      %s71 = ssub.s32 %s25, %s34
      %s72 = ssub.s32 %s24, %s38
      %s73 = sor.u32 %s71, %s72
      %p74 = scmp.eq.s32.totalorder %s73, 0
      %s76 = sadd.s32 %s75, 1
      %s77 = scalar_select %p74, %s75, %s76
      %p80 = pneg %p74
      %p81 = scmp.eq.s32.totalorder %s16, 1
      %p82 = por %p80, %p81
      %p83 = scmp.ne.s32.totalorder %s75, %s78
      %p84 = scmp.eq.s32.totalorder %s16, 0
      %p85 = por %p83, %p84
      %p86 = scmp.ne.s32.totalorder %s75, %s78
      %p87 = scmp.eq.s32.totalorder %s21, 1
      %p88 = por %p86, %p87
      %p89 = scmp.ne.s32.totalorder %s78, %s79
      %p90 = scmp.eq.s32.totalorder %s21, 0
      %p91 = por %p89, %p90
      %p92 = scmp.ne.s32.totalorder %s78, %s79
      %p93 = scmp.eq.s32.totalorder %s22, 1
      %p94 = por %p92, %p93
      %p96 = scmp.ne.s32.totalorder %s79, %s95
      %p97 = scmp.eq.s32.totalorder %s22, 0
      %p98 = por %p96, %p97
      %s99 = ssub.s32 %s25, %s34
      %p100 = scmp.eq.s32.totalorder %s99, 0
      %s102 = sadd.s32 %s101, 1
      %s103 = scalar_select %p100, %s101, %s102
      %p106 = pneg %p100
      %p107 = scmp.eq.s32.totalorder %s16, 1
      %p108 = por %p106, %p107
      %p109 = scmp.ne.s32.totalorder %s101, %s104
      %p110 = scmp.eq.s32.totalorder %s16, 0
      %p111 = por %p109, %p110
      %p112 = scmp.ne.s32.totalorder %s101, %s104
      %p113 = scmp.eq.s32.totalorder %s21, 1
      %p114 = por %p112, %p113
      %p115 = scmp.ne.s32.totalorder %s104, %s105
      %p116 = scmp.eq.s32.totalorder %s21, 0
      %p117 = por %p115, %p116
      %p118 = scmp.ne.s32.totalorder %s104, %s105
      %p119 = scmp.eq.s32.totalorder %s22, 1
      %p120 = por %p118, %p119
      %p122 = scmp.ne.s32.totalorder %s105, %s121
      %p123 = scmp.eq.s32.totalorder %s22, 0
      %p124 = por %p122, %p123
      %s125 = ssub.s32 %s25, %s34
      %p126 = scmp.eq.s32.totalorder %s125, 0
      %s128 = sadd.s32 %s127, 1
      %s129 = scalar_select %p126, %s127, %s128
      %p132 = pneg %p126
      %p133 = scmp.eq.s32.totalorder %s16, 1
      %p134 = por %p132, %p133
      %p135 = scmp.ne.s32.totalorder %s127, %s130
      %p136 = scmp.eq.s32.totalorder %s16, 0
      %p137 = por %p135, %p136
      %p138 = scmp.ne.s32.totalorder %s127, %s130
      %p139 = scmp.eq.s32.totalorder %s21, 1
      %p140 = por %p138, %p139
      %p141 = scmp.ne.s32.totalorder %s130, %s131
      %p142 = scmp.eq.s32.totalorder %s21, 0
      %p143 = por %p141, %p142
      %p144 = scmp.ne.s32.totalorder %s130, %s131
      %p145 = scmp.eq.s32.totalorder %s22, 1
      %p146 = por %p144, %p145
      %p148 = scmp.ne.s32.totalorder %s131, %s147
      %p149 = scmp.eq.s32.totalorder %s22, 0
      %p150 = por %p148, %p149
      %s151 = ssub.s32 %s24, %s38
      %p152 = scmp.eq.s32.totalorder %s151, 0
      %s154 = sadd.s32 %s153, 1
      %s155 = scalar_select %p152, %s153, %s154
      %p158 = pneg %p152
      %p159 = scmp.eq.s32.totalorder %s16, 1
      %p160 = por %p158, %p159
      %p161 = scmp.ne.s32.totalorder %s153, %s156
      %p162 = scmp.eq.s32.totalorder %s16, 0
      %p163 = por %p161, %p162
      %p164 = scmp.ne.s32.totalorder %s153, %s156
      %p165 = scmp.eq.s32.totalorder %s21, 1
      %p166 = por %p164, %p165
      %p167 = scmp.ne.s32.totalorder %s156, %s157
      %p168 = scmp.eq.s32.totalorder %s21, 0
      %p169 = por %p167, %p168
      %p170 = scmp.ne.s32.totalorder %s156, %s157
      %p171 = scmp.eq.s32.totalorder %s22, 1
      %p172 = por %p170, %p171
      %p174 = scmp.ne.s32.totalorder %s157, %s173
      %p175 = scmp.eq.s32.totalorder %s22, 0
      %p176 = por %p174, %p175
      %s177 = ssub.s32 %s24, %s38
      %p178 = scmp.eq.s32.totalorder %s177, 0
      %s180 = sadd.s32 %s179, 1
      %s181 = scalar_select %p178, %s179, %s180
      %p184 = pneg %p178
      %p185 = scmp.eq.s32.totalorder %s16, 1
      %p186 = por %p184, %p185
      %p187 = scmp.ne.s32.totalorder %s179, %s182
      %p188 = scmp.eq.s32.totalorder %s16, 0
      %p189 = por %p187, %p188
      %p190 = scmp.ne.s32.totalorder %s179, %s182
      %p191 = scmp.eq.s32.totalorder %s21, 1
      %p192 = por %p190, %p191
      %p193 = scmp.ne.s32.totalorder %s182, %s183
      %p194 = scmp.eq.s32.totalorder %s21, 0
      %p195 = por %p193, %p194
      %p196 = scmp.ne.s32.totalorder %s182, %s183
      %p197 = scmp.eq.s32.totalorder %s22, 1
      %p198 = por %p196, %p197
      %p200 = scmp.ne.s32.totalorder %s183, %s199
      %p201 = scmp.eq.s32.totalorder %s22, 0
      %p202 = por %p200, %p201
      %s203 = ssub.s32 %s23, %s42
      %s204 = ssub.s32 %s24, %s38
      %s205 = sor.u32 %s203, %s204
      %p206 = scmp.eq.s32.totalorder %s205, 0
      %s208 = sadd.s32 %s207, 1
      %s209 = scalar_select %p206, %s207, %s208
      %p212 = pneg %p206
      %p213 = scmp.eq.s32.totalorder %s16, 1
      %p214 = por %p212, %p213
      %p215 = scmp.ne.s32.totalorder %s207, %s210
      %p216 = scmp.eq.s32.totalorder %s16, 0
      %p217 = por %p215, %p216
      %p218 = scmp.ne.s32.totalorder %s207, %s210
      %p219 = scmp.eq.s32.totalorder %s21, 1
      %p220 = por %p218, %p219
      %p221 = scmp.ne.s32.totalorder %s210, %s211
      %p222 = scmp.eq.s32.totalorder %s21, 0
      %p223 = por %p221, %p222
      %p224 = scmp.ne.s32.totalorder %s210, %s211
      %p225 = scmp.eq.s32.totalorder %s22, 1
      %p226 = por %p224, %p225
      %p228 = scmp.ne.s32.totalorder %s211, %s227
      %p229 = scmp.eq.s32.totalorder %s22, 0
      %p230 = por %p228, %p229
      %p231 = scmp.le.s32.totalorder 1, %s16
      %p232 = scmp.lt.s32.totalorder %s16, 3
      %p233 = pnand %p231, %p232
      %p234 = pneg %p233
      // Predicated region
      $region9: #{fused_matmul.1} parent=5 // pred_check
        _
      $region10: #{fused_matmul.1} parent=5 // pred_check_branch
        %236 = sbr.rel (%p233) target = $region12
      $region11: #{fused_matmul.1} parent=5 // pred_region
        %s237 = ssub.s32 %s16, 1
        // Predicated region
        $region13: #{fused_matmul.1} parent=11 // pred_check
          %p238 = pneg %p91
        $region14: #{fused_matmul.1} parent=11 // pred_check_branch
          %240 = sbr.rel (%p238) target = $region16
        $region15: #{fused_matmul.1} parent=11 // pred_region
          %s241 = smul.u32 32, %s28
          %s243 = ssub.s32 2048, 2048
          %244 = vsyncadd [#allocation5], %s243
          %s245 = sadd.s32 %s27, %s241
          %s246 = smul.addr %s245, 64
          %s247 = scalar_lea.hbm %s1, %s246
          %s248 = sshll.u32 [#allocation4], 4
          %s249 = int_to_ptr.vmem [resolvable:$true] %s248
          %254 = dma.hbm_to_vmem [thread:$0]  %s247, 2048, %s249, [#allocation5], 64, 64, 4
        $region16: #{fused_matmul.1} parent=11 // pred_fallthru
          _
        // Predicated region
        $region17: #{fused_matmul.1} parent=11 // pred_check
          %p255 = pneg %p117
        $region18: #{fused_matmul.1} parent=11 // pred_check_branch
          %257 = sbr.rel (%p255) target = $region20
        $region19: #{fused_matmul.1} parent=11 // pred_region
          %s258 = smul.u32 2, %s28
          %p259 = scmp.lt.s32.totalorder %s258, 1
          %s260 = scalar_select %p259, %s258, 1
          %s261 = scalar_lea.vmem %s2, %s260
          %s262 = smul.u32 2, %s28
        $region20: #{fused_matmul.1} parent=11 // pred_fallthru
          _
        // Predicated region
        $region21: #{fused_matmul.1} parent=11 // pred_check
          %p263 = pneg %p143
        $region22: #{fused_matmul.1} parent=11 // pred_check_branch
          %265 = sbr.rel (%p263) target = $region24
        $region23: #{fused_matmul.1} parent=11 // pred_region
          %s266 = smul.u32 2, %s28
          %p267 = scmp.lt.s32.totalorder %s266, 1
          %s268 = scalar_select %p267, %s266, 1
          %s269 = scalar_lea.vmem %s3, %s268
          %s270 = smul.u32 2, %s28
        $region24: #{fused_matmul.1} parent=11 // pred_fallthru
          _
        // Predicated region
        $region25: #{fused_matmul.1} parent=11 // pred_check
          %p271 = pneg %p169
        $region26: #{fused_matmul.1} parent=11 // pred_check_branch
          %273 = sbr.rel (%p271) target = $region28
        $region27: #{fused_matmul.1} parent=11 // pred_region
          %p274 = scmp.lt.s32.totalorder %s27, 0
          %s275 = scalar_select %p274, %s27, 0
          %s276 = scalar_lea.vmem %s4, %s275
        $region28: #{fused_matmul.1} parent=11 // pred_fallthru
          _
        // Predicated region
        $region29: #{fused_matmul.1} parent=11 // pred_check
          %p277 = pneg %p195
        $region30: #{fused_matmul.1} parent=11 // pred_check_branch
          %279 = sbr.rel (%p277) target = $region32
        $region31: #{fused_matmul.1} parent=11 // pred_region
          %p280 = scmp.lt.s32.totalorder %s27, 0
          %s281 = scalar_select %p280, %s27, 0
          %s282 = scalar_lea.vmem %s5, %s281
        $region32: #{fused_matmul.1} parent=11 // pred_fallthru
          _
      $region12: #{fused_matmul.1} parent=5 // pred_fallthru
        _
      %p283 = scmp.lt.s32.totalorder %s16, 2
      // Predicated region
      $region33: #{fused_matmul.1} parent=5 // pred_check
        %p284 = pneg %p283
      $region34: #{fused_matmul.1} parent=5 // pred_check_branch
        %286 = sbr.rel (%p284) target = $region36
      $region35: #{fused_matmul.1} parent=5 // pred_region
        // Predicated region
        $region37: #{fused_matmul.1} parent=35 // pred_check
          %p287 = pneg %p57
        $region38: #{fused_matmul.1} parent=35 // pred_check_branch
          %289 = sbr.rel (%p287) target = $region40
        $region39: #{fused_matmul.1} parent=35 // pred_region
          %s290 = sand.u32 %s47, 1
          %s291 = scalar_lea.sflag [#allocation3], %s290
          %s292 = sand.u32 %s47, 1
          %s293 = smul.addr %s292, 512
          %s294 = scalar_lea.vmem [#allocation2], %s293
          %s295 = smul.u32 32, %s23
          %s296 = smul.u32 2, %s25
          %s298 = ssub.s32 8192, 8192
          %299 = vsyncadd %s291, %s298
          %s300 = smul.addr %s295, 2
          %s301 = sadd.s32 %s296, %s300
          %s302 = smul.addr %s301, 128
          %s303 = scalar_lea.hbm %s0, %s302
          %s304 = sshll.u32 %s294, 4
          %s305 = int_to_ptr.vmem [resolvable:$true] %s304
          %310 = dma.hbm_to_vmem [thread:$0]  %s303, 8192, %s305, %s291, 256, 256, 16
        $region40: #{fused_matmul.1} parent=35 // pred_fallthru
          _
      $region36: #{fused_matmul.1} parent=5 // pred_fallthru
        _
      %p311 = scmp.le.s32.totalorder 1, %s16
      %p312 = scmp.lt.s32.totalorder %s16, 3
      %p313 = pnand %p311, %p312
      %p314 = pneg %p313
      // Predicated region
      $region41: #{fused_matmul.1} parent=5 // pred_check
        _
      $region42: #{fused_matmul.1} parent=5 // pred_check_branch
        %316 = sbr.rel (%p313) target = $region44
      $region43: #{fused_matmul.1} parent=5 // pred_region
        %s317 = ssub.s32 %s16, 1
        %s318 = sand.u32 %s50, 1
        %s319 = scalar_lea.sflag [#allocation3], %s318
        %s320 = sand.u32 %s50, 1
        %s321 = smul.addr %s320, 512
        %s322 = scalar_lea.vmem [#allocation2], %s321
        // Predicated region
        $region45: #{fused_matmul.1} parent=43 // pred_check
          %p323 = pneg %p63
        $region46: #{fused_matmul.1} parent=43 // pred_check_branch
          %325 = sbr.rel (%p323) target = $region48
        $region47: #{fused_matmul.1} parent=43 // pred_region
          %326 = dma.done %s319, 8192
        $region48: #{fused_matmul.1} parent=43 // pred_fallthru
          _
        // Predicated region
        $region49: #{fused_matmul.1} parent=43 // pred_check
          %p327 = pneg %p91
        $region50: #{fused_matmul.1} parent=43 // pred_check_branch
          %329 = sbr.rel (%p327) target = $region52
        $region51: #{fused_matmul.1} parent=43 // pred_region
          %330 = dma.done [#allocation5], 2048
        $region52: #{fused_matmul.1} parent=43 // pred_fallthru
          _
        %s331 = sand.u32 %s50, 1
        %s332 = scalar_lea.sflag [#allocation3], %s331
        %s333 = sand.u32 %s50, 1
        %s334 = smul.addr %s333, 512
        %s335 = scalar_lea.vmem [#allocation2], %s334
        %p336 = pneg %p63
        %p337 = pneg %p60
        %p338 = pneg %p91
        %p339 = pneg %p88
        %s340 = smul.u32 2, %s28
        %p341 = scmp.lt.s32.totalorder %s340, 1
        %s342 = scalar_select %p341, %s340, 1
        %s343 = scalar_lea.vmem %s2, %s342
        %p344 = pneg %p117
        %p345 = pneg %p114
        %s346 = smul.u32 2, %s28
        %p347 = scmp.lt.s32.totalorder %s346, 1
        %s348 = scalar_select %p347, %s346, 1
        %s349 = scalar_lea.vmem %s3, %s348
        %p350 = pneg %p143
        %p351 = pneg %p140
        %p352 = scmp.lt.s32.totalorder %s27, 0
        %s353 = scalar_select %p352, %s27, 0
        %s354 = scalar_lea.vmem %s4, %s353
        %p355 = pneg %p169
        %p356 = pneg %p166
        %p357 = scmp.lt.s32.totalorder %s27, 0
        %s358 = scalar_select %p357, %s27, 0
        %s359 = scalar_lea.vmem %s5, %s358
        %p360 = pneg %p195
        %p361 = pneg %p192
        %p362 = pneg %p223
        %p363 = pneg %p220
        %s364 = smul.u32 32, %s26
        %p365 = scmp.lt.s32.totalorder %s364, 63
        %s366 = scalar_select %p365, %s364, 63
        %p367 = scmp.lt.s32.totalorder %s27, 0
        %s368 = scalar_select %p367, %s27, 0
        %s369 = sadd.s32 %s368, %s366
        %s370 = smul.addr %s369, 8
        %s371 = scalar_lea.vmem %s6, %s370
        %s372 = smul.u32 32, %s26
        %s373 = smul.u32 2, %s28
        %s374 = smul.u32 32, %s28
        %s375 = smul.u32 2, %s28
        %p376 = scmp.lt.s32.totalorder %s375, 1
        %s377 = scalar_select %p376, %s375, 1
        %s378 = scalar_lea.vmem %s2, %s377
        %s379 = smul.u32 2, %s28
        %s380 = smul.u32 2, %s28
        %p381 = scmp.lt.s32.totalorder %s380, 1
        %s382 = scalar_select %p381, %s380, 1
        %s383 = scalar_lea.vmem %s3, %s382
        %s384 = smul.u32 2, %s28
        %p385 = scmp.lt.s32.totalorder %s27, 0
        %s386 = scalar_select %p385, %s27, 0
        %s387 = scalar_lea.vmem %s4, %s386
        %p388 = scmp.lt.s32.totalorder %s27, 0
        %s389 = scalar_select %p388, %s27, 0
        %s390 = scalar_lea.vmem %s5, %s389
        %s391 = smul.u32 32, %s26
        %p392 = scmp.lt.s32.totalorder %s391, 63
        %s393 = scalar_select %p392, %s391, 63
        %p394 = scmp.lt.s32.totalorder %s27, 0
        %s395 = scalar_select %p394, %s27, 0
        %s396 = sadd.s32 %s395, %s393
        %s397 = smul.addr %s396, 8
        %s398 = scalar_lea.vmem %s6, %s397
        %s399 = smul.u32 32, %s26
        %p401 = scmp.eq.s32.totalorder %s28, 0
        // Predicated region
        $region53: #{fused_matmul.1} parent=43 // pred_check
          %p402 = pneg %p401
        $region54: #{fused_matmul.1} parent=43 // pred_check_branch
          %404 = sbr.rel (%p402) target = $region56
        $region55: #{fused_matmul.1} parent=43 // pred_region
          %405 = vst [vmem:[%s398] sm:$0xff] 0.0
          %406 = vst [vmem:[%s398 + $0x8] sm:$0xff] 0.0
          %407 = vst [vmem:[%s398 + $0x10] sm:$0xff] 0.0
          %408 = vst [vmem:[%s398 + $0x18] sm:$0xff] 0.0
          %409 = vst [vmem:[%s398 + $0x20] sm:$0xff] 0.0
          %410 = vst [vmem:[%s398 + $0x28] sm:$0xff] 0.0
          %411 = vst [vmem:[%s398 + $0x30] sm:$0xff] 0.0
          %412 = vst [vmem:[%s398 + $0x38] sm:$0xff] 0.0
          %413 = vst [vmem:[%s398 + $0x40] sm:$0xff] 0.0
          %414 = vst [vmem:[%s398 + $0x48] sm:$0xff] 0.0
          %415 = vst [vmem:[%s398 + $0x50] sm:$0xff] 0.0
          %416 = vst [vmem:[%s398 + $0x58] sm:$0xff] 0.0
          %417 = vst [vmem:[%s398 + $0x60] sm:$0xff] 0.0
          %418 = vst [vmem:[%s398 + $0x68] sm:$0xff] 0.0
          %419 = vst [vmem:[%s398 + $0x70] sm:$0xff] 0.0
          %420 = vst [vmem:[%s398 + $0x78] sm:$0xff] 0.0
          %421 = vst [vmem:[%s398 + $0x80] sm:$0xff] 0.0
          %422 = vst [vmem:[%s398 + $0x88] sm:$0xff] 0.0
          %423 = vst [vmem:[%s398 + $0x90] sm:$0xff] 0.0
          %424 = vst [vmem:[%s398 + $0x98] sm:$0xff] 0.0
          %425 = vst [vmem:[%s398 + $0xa0] sm:$0xff] 0.0
          %426 = vst [vmem:[%s398 + $0xa8] sm:$0xff] 0.0
          %427 = vst [vmem:[%s398 + $0xb0] sm:$0xff] 0.0
          %428 = vst [vmem:[%s398 + $0xb8] sm:$0xff] 0.0
          %429 = vst [vmem:[%s398 + $0xc0] sm:$0xff] 0.0
          %430 = vst [vmem:[%s398 + $0xc8] sm:$0xff] 0.0
          %431 = vst [vmem:[%s398 + $0xd0] sm:$0xff] 0.0
          %432 = vst [vmem:[%s398 + $0xd8] sm:$0xff] 0.0
          %433 = vst [vmem:[%s398 + $0xe0] sm:$0xff] 0.0
          %434 = vst [vmem:[%s398 + $0xe8] sm:$0xff] 0.0
          %435 = vst [vmem:[%s398 + $0xf0] sm:$0xff] 0.0
          %436 = vst [vmem:[%s398 + $0xf8] sm:$0xff] 0.0
        $region56: #{fused_matmul.1} parent=43 // pred_fallthru
          _
        %v437 = vld [vmem:[%s322] sm:$0xff]
        %v438 = vld [vmem:[%s322 + $0x8] sm:$0xff]
        %v439 = vld [vmem:[%s322 + $0x10] sm:$0xff]
        %v440 = vld [vmem:[%s322 + $0x18] sm:$0xff]
        %v441 = vld [vmem:[%s322 + $0x20] sm:$0xff]
        %v442 = vld [vmem:[%s322 + $0x28] sm:$0xff]
        %v443 = vld [vmem:[%s322 + $0x30] sm:$0xff]
        %v444 = vld [vmem:[%s322 + $0x38] sm:$0xff]
        %v445 = vld [vmem:[%s322 + $0x40] sm:$0xff]
        %v446 = vld [vmem:[%s322 + $0x48] sm:$0xff]
        %v447 = vld [vmem:[%s322 + $0x50] sm:$0xff]
        %v448 = vld [vmem:[%s322 + $0x58] sm:$0xff]
        %v449 = vld [vmem:[%s322 + $0x60] sm:$0xff]
        %v450 = vld [vmem:[%s322 + $0x68] sm:$0xff]
        %v451 = vld [vmem:[%s322 + $0x70] sm:$0xff]
        %v452 = vld [vmem:[%s322 + $0x78] sm:$0xff]
        %v453 = vld [vmem:[%s322 + $0x80] sm:$0xff]
        %v454 = vld [vmem:[%s322 + $0x88] sm:$0xff]
        %v455 = vld [vmem:[%s322 + $0x90] sm:$0xff]
        %v456 = vld [vmem:[%s322 + $0x98] sm:$0xff]
        %v457 = vld [vmem:[%s322 + $0xa0] sm:$0xff]
        %v458 = vld [vmem:[%s322 + $0xa8] sm:$0xff]
        %v459 = vld [vmem:[%s322 + $0xb0] sm:$0xff]
        %v460 = vld [vmem:[%s322 + $0xb8] sm:$0xff]
        %v461 = vld [vmem:[%s322 + $0xc0] sm:$0xff]
        %v462 = vld [vmem:[%s322 + $0xc8] sm:$0xff]
        %v463 = vld [vmem:[%s322 + $0xd0] sm:$0xff]
        %v464 = vld [vmem:[%s322 + $0xd8] sm:$0xff]
        %v465 = vld [vmem:[%s322 + $0xe0] sm:$0xff]
        %v466 = vld [vmem:[%s322 + $0xe8] sm:$0xff]
        %v467 = vld [vmem:[%s322 + $0xf0] sm:$0xff]
        %v468 = vld [vmem:[%s322 + $0xf8] sm:$0xff]
        %v469 = vld [vmem:[%s322 + $0x100] sm:$0xff]
        %v470 = vld [vmem:[%s322 + $0x108] sm:$0xff]
        %v471 = vld [vmem:[%s322 + $0x110] sm:$0xff]
        %v472 = vld [vmem:[%s322 + $0x118] sm:$0xff]
        %v473 = vld [vmem:[%s322 + $0x120] sm:$0xff]
        %v474 = vld [vmem:[%s322 + $0x128] sm:$0xff]
        %v475 = vld [vmem:[%s322 + $0x130] sm:$0xff]
        %v476 = vld [vmem:[%s322 + $0x138] sm:$0xff]
        %v477 = vld [vmem:[%s322 + $0x140] sm:$0xff]
        %v478 = vld [vmem:[%s322 + $0x148] sm:$0xff]
        %v479 = vld [vmem:[%s322 + $0x150] sm:$0xff]
        %v480 = vld [vmem:[%s322 + $0x158] sm:$0xff]
        %v481 = vld [vmem:[%s322 + $0x160] sm:$0xff]
        %v482 = vld [vmem:[%s322 + $0x168] sm:$0xff]
        %v483 = vld [vmem:[%s322 + $0x170] sm:$0xff]
        %v484 = vld [vmem:[%s322 + $0x178] sm:$0xff]
        %v485 = vld [vmem:[%s322 + $0x180] sm:$0xff]
        %v486 = vld [vmem:[%s322 + $0x188] sm:$0xff]
        %v487 = vld [vmem:[%s322 + $0x190] sm:$0xff]
        %v488 = vld [vmem:[%s322 + $0x198] sm:$0xff]
        %v489 = vld [vmem:[%s322 + $0x1a0] sm:$0xff]
        %v490 = vld [vmem:[%s322 + $0x1a8] sm:$0xff]
        %v491 = vld [vmem:[%s322 + $0x1b0] sm:$0xff]
        %v492 = vld [vmem:[%s322 + $0x1b8] sm:$0xff]
        %v493 = vld [vmem:[%s322 + $0x1c0] sm:$0xff]
        %v494 = vld [vmem:[%s322 + $0x1c8] sm:$0xff]
        %v495 = vld [vmem:[%s322 + $0x1d0] sm:$0xff]
        %v496 = vld [vmem:[%s322 + $0x1d8] sm:$0xff]
        %v497 = vld [vmem:[%s322 + $0x1e0] sm:$0xff]
        %v498 = vld [vmem:[%s322 + $0x1e8] sm:$0xff]
        %v499 = vld [vmem:[%s322 + $0x1f0] sm:$0xff]
        %v500 = vld [vmem:[%s322 + $0x1f8] sm:$0xff]
        %v501 = vld [vmem:[%s378] sm:$0x3]
        %v503 = vlaneseq
        %v504 = vshrl.u32 %v503, 7
        %v505 = vsub.s32 0, %v504
        %v506 = vrot.slane %v501, %v505
        %v507 = vlaneseq
        %v508 = vshrl.u32 %v507, 7
        %v509 = vsub.s32 1, %v508
        %v510 = vrot.slane %v501, %v509
        %v513 = vmul.f32 %v437, %v506
        %v514 = vmul.f32 %v438, %v510
        %v515 = vmul.f32 %v439, %v506
        %v516 = vmul.f32 %v440, %v510
        %v517 = vmul.f32 %v441, %v506
        %v518 = vmul.f32 %v442, %v510
        %v519 = vmul.f32 %v443, %v506
        %v520 = vmul.f32 %v444, %v510
        %v521 = vmul.f32 %v445, %v506
        %v522 = vmul.f32 %v446, %v510
        %v523 = vmul.f32 %v447, %v506
        %v524 = vmul.f32 %v448, %v510
        %v525 = vmul.f32 %v449, %v506
        %v526 = vmul.f32 %v450, %v510
        %v527 = vmul.f32 %v451, %v506
        %v528 = vmul.f32 %v452, %v510
        %v529 = vmul.f32 %v453, %v506
        %v530 = vmul.f32 %v454, %v510
        %v531 = vmul.f32 %v455, %v506
        %v532 = vmul.f32 %v456, %v510
        %v533 = vmul.f32 %v457, %v506
        %v534 = vmul.f32 %v458, %v510
        %v535 = vmul.f32 %v459, %v506
        %v536 = vmul.f32 %v460, %v510
        %v537 = vmul.f32 %v461, %v506
        %v538 = vmul.f32 %v462, %v510
        %v539 = vmul.f32 %v463, %v506
        %v540 = vmul.f32 %v464, %v510
        %v541 = vmul.f32 %v465, %v506
        %v542 = vmul.f32 %v466, %v510
        %v543 = vmul.f32 %v467, %v506
        %v544 = vmul.f32 %v468, %v510
        %v545 = vmul.f32 %v469, %v506
        %v546 = vmul.f32 %v470, %v510
        %v547 = vmul.f32 %v471, %v506
        %v548 = vmul.f32 %v472, %v510
        %v549 = vmul.f32 %v473, %v506
        %v550 = vmul.f32 %v474, %v510
        %v551 = vmul.f32 %v475, %v506
        %v552 = vmul.f32 %v476, %v510
        %v553 = vmul.f32 %v477, %v506
        %v554 = vmul.f32 %v478, %v510
        %v555 = vmul.f32 %v479, %v506
        %v556 = vmul.f32 %v480, %v510
        %v557 = vmul.f32 %v481, %v506
        %v558 = vmul.f32 %v482, %v510
        %v559 = vmul.f32 %v483, %v506
        %v560 = vmul.f32 %v484, %v510
        %v561 = vmul.f32 %v485, %v506
        %v562 = vmul.f32 %v486, %v510
        %v563 = vmul.f32 %v487, %v506
        %v564 = vmul.f32 %v488, %v510
        %v565 = vmul.f32 %v489, %v506
        %v566 = vmul.f32 %v490, %v510
        %v567 = vmul.f32 %v491, %v506
        %v568 = vmul.f32 %v492, %v510
        %v569 = vmul.f32 %v493, %v506
        %v570 = vmul.f32 %v494, %v510
        %v571 = vmul.f32 %v495, %v506
        %v572 = vmul.f32 %v496, %v510
        %v573 = vmul.f32 %v497, %v506
        %v574 = vmul.f32 %v498, %v510
        %v575 = vmul.f32 %v499, %v506
        %v576 = vmul.f32 %v500, %v510
        %v577 = vld [vmem:[%s383] sm:$0x3]
        %v579 = vlaneseq
        %v580 = vshrl.u32 %v579, 7
        %v581 = vsub.s32 0, %v580
        %v582 = vrot.slane %v577, %v581
        %v583 = vlaneseq
        %v584 = vshrl.u32 %v583, 7
        %v585 = vsub.s32 1, %v584
        %v586 = vrot.slane %v577, %v585
        %v589 = vadd.f32 %v513, %v582
        %v590 = vadd.f32 %v514, %v586
        %v591 = vadd.f32 %v515, %v582
        %v592 = vadd.f32 %v516, %v586
        %v593 = vadd.f32 %v517, %v582
        %v594 = vadd.f32 %v518, %v586
        %v595 = vadd.f32 %v519, %v582
        %v596 = vadd.f32 %v520, %v586
        %v597 = vadd.f32 %v521, %v582
        %v598 = vadd.f32 %v522, %v586
        %v599 = vadd.f32 %v523, %v582
        %v600 = vadd.f32 %v524, %v586
        %v601 = vadd.f32 %v525, %v582
        %v602 = vadd.f32 %v526, %v586
        %v603 = vadd.f32 %v527, %v582
        %v604 = vadd.f32 %v528, %v586
        %v605 = vadd.f32 %v529, %v582
        %v606 = vadd.f32 %v530, %v586
        %v607 = vadd.f32 %v531, %v582
        %v608 = vadd.f32 %v532, %v586
        %v609 = vadd.f32 %v533, %v582
        %v610 = vadd.f32 %v534, %v586
        %v611 = vadd.f32 %v535, %v582
        %v612 = vadd.f32 %v536, %v586
        %v613 = vadd.f32 %v537, %v582
        %v614 = vadd.f32 %v538, %v586
        %v615 = vadd.f32 %v539, %v582
        %v616 = vadd.f32 %v540, %v586
        %v617 = vadd.f32 %v541, %v582
        %v618 = vadd.f32 %v542, %v586
        %v619 = vadd.f32 %v543, %v582
        %v620 = vadd.f32 %v544, %v586
        %v621 = vadd.f32 %v545, %v582
        %v622 = vadd.f32 %v546, %v586
        %v623 = vadd.f32 %v547, %v582
        %v624 = vadd.f32 %v548, %v586
        %v625 = vadd.f32 %v549, %v582
        %v626 = vadd.f32 %v550, %v586
        %v627 = vadd.f32 %v551, %v582
        %v628 = vadd.f32 %v552, %v586
        %v629 = vadd.f32 %v553, %v582
        %v630 = vadd.f32 %v554, %v586
        %v631 = vadd.f32 %v555, %v582
        %v632 = vadd.f32 %v556, %v586
        %v633 = vadd.f32 %v557, %v582
        %v634 = vadd.f32 %v558, %v586
        %v635 = vadd.f32 %v559, %v582
        %v636 = vadd.f32 %v560, %v586
        %v637 = vadd.f32 %v561, %v582
        %v638 = vadd.f32 %v562, %v586
        %v639 = vadd.f32 %v563, %v582
        %v640 = vadd.f32 %v564, %v586
        %v641 = vadd.f32 %v565, %v582
        %v642 = vadd.f32 %v566, %v586
        %v643 = vadd.f32 %v567, %v582
        %v644 = vadd.f32 %v568, %v586
        %v645 = vadd.f32 %v569, %v582
        %v646 = vadd.f32 %v570, %v586
        %v647 = vadd.f32 %v571, %v582
        %v648 = vadd.f32 %v572, %v586
        %v649 = vadd.f32 %v573, %v582
        %v650 = vadd.f32 %v574, %v586
        %v651 = vadd.f32 %v575, %v582
        %v652 = vadd.f32 %v576, %v586
        %v653 = vld [vmem:[%s398] sm:$0xff]
        %v654 = vld [vmem:[%s398 + $0x8] sm:$0xff]
        %v655 = vld [vmem:[%s398 + $0x10] sm:$0xff]
        %v656 = vld [vmem:[%s398 + $0x18] sm:$0xff]
        %v657 = vld [vmem:[%s398 + $0x20] sm:$0xff]
        %v658 = vld [vmem:[%s398 + $0x28] sm:$0xff]
        %v659 = vld [vmem:[%s398 + $0x30] sm:$0xff]
        %v660 = vld [vmem:[%s398 + $0x38] sm:$0xff]
        %v661 = vld [vmem:[%s398 + $0x40] sm:$0xff]
        %v662 = vld [vmem:[%s398 + $0x48] sm:$0xff]
        %v663 = vld [vmem:[%s398 + $0x50] sm:$0xff]
        %v664 = vld [vmem:[%s398 + $0x58] sm:$0xff]
        %v665 = vld [vmem:[%s398 + $0x60] sm:$0xff]
        %v666 = vld [vmem:[%s398 + $0x68] sm:$0xff]
        %v667 = vld [vmem:[%s398 + $0x70] sm:$0xff]
        %v668 = vld [vmem:[%s398 + $0x78] sm:$0xff]
        %v669 = vld [vmem:[%s398 + $0x80] sm:$0xff]
        %v670 = vld [vmem:[%s398 + $0x88] sm:$0xff]
        %v671 = vld [vmem:[%s398 + $0x90] sm:$0xff]
        %v672 = vld [vmem:[%s398 + $0x98] sm:$0xff]
        %v673 = vld [vmem:[%s398 + $0xa0] sm:$0xff]
        %v674 = vld [vmem:[%s398 + $0xa8] sm:$0xff]
        %v675 = vld [vmem:[%s398 + $0xb0] sm:$0xff]
        %v676 = vld [vmem:[%s398 + $0xb8] sm:$0xff]
        %v677 = vld [vmem:[%s398 + $0xc0] sm:$0xff]
        %v678 = vld [vmem:[%s398 + $0xc8] sm:$0xff]
        %v679 = vld [vmem:[%s398 + $0xd0] sm:$0xff]
        %v680 = vld [vmem:[%s398 + $0xd8] sm:$0xff]
        %v681 = vld [vmem:[%s398 + $0xe0] sm:$0xff]
        %v682 = vld [vmem:[%s398 + $0xe8] sm:$0xff]
        %v683 = vld [vmem:[%s398 + $0xf0] sm:$0xff]
        %v684 = vld [vmem:[%s398 + $0xf8] sm:$0xff]
        %v685 = vpack.c.bf16 %v591, %v589
        %v686 = vpack.c.bf16 %v592, %v590
        %v687 = vpack.c.bf16 %v595, %v593
        %v688 = vpack.c.bf16 %v596, %v594
        %v689 = vpack.c.bf16 %v599, %v597
        %v690 = vpack.c.bf16 %v600, %v598
        %v691 = vpack.c.bf16 %v603, %v601
        %v692 = vpack.c.bf16 %v604, %v602
        %v693 = vpack.c.bf16 %v607, %v605
        %v694 = vpack.c.bf16 %v608, %v606
        %v695 = vpack.c.bf16 %v611, %v609
        %v696 = vpack.c.bf16 %v612, %v610
        %v697 = vpack.c.bf16 %v615, %v613
        %v698 = vpack.c.bf16 %v616, %v614
        %v699 = vpack.c.bf16 %v619, %v617
        %v700 = vpack.c.bf16 %v620, %v618
        %v701 = vpack.c.bf16 %v623, %v621
        %v702 = vpack.c.bf16 %v624, %v622
        %v703 = vpack.c.bf16 %v627, %v625
        %v704 = vpack.c.bf16 %v628, %v626
        %v705 = vpack.c.bf16 %v631, %v629
        %v706 = vpack.c.bf16 %v632, %v630
        %v707 = vpack.c.bf16 %v635, %v633
        %v708 = vpack.c.bf16 %v636, %v634
        %v709 = vpack.c.bf16 %v639, %v637
        %v710 = vpack.c.bf16 %v640, %v638
        %v711 = vpack.c.bf16 %v643, %v641
        %v712 = vpack.c.bf16 %v644, %v642
        %v713 = vpack.c.bf16 %v647, %v645
        %v714 = vpack.c.bf16 %v648, %v646
        %v715 = vpack.c.bf16 %v651, %v649
        %v716 = vpack.c.bf16 %v652, %v650
        %v717 = vld [vmem:[#allocation4] sm:$0xf]
        %v718 = vld [vmem:[#allocation4 + $0x4] sm:$0xf]
        %v719 = vld [vmem:[#allocation4 + $0x8] sm:$0xf]
        %v720 = vld [vmem:[#allocation4 + $0xc] sm:$0xf]
        %v721 = vld [vmem:[#allocation4 + $0x10] sm:$0xf]
        %v722 = vld [vmem:[#allocation4 + $0x14] sm:$0xf]
        %v723 = vld [vmem:[#allocation4 + $0x18] sm:$0xf]
        %v724 = vld [vmem:[#allocation4 + $0x1c] sm:$0xf]
        %v725 = vld [vmem:[#allocation4 + $0x20] sm:$0xf]
        %v726 = vld [vmem:[#allocation4 + $0x24] sm:$0xf]
        %v727 = vld [vmem:[#allocation4 + $0x28] sm:$0xf]
        %v728 = vld [vmem:[#allocation4 + $0x2c] sm:$0xf]
        %v729 = vld [vmem:[#allocation4 + $0x30] sm:$0xf]
        %v730 = vld [vmem:[#allocation4 + $0x34] sm:$0xf]
        %v731 = vld [vmem:[#allocation4 + $0x38] sm:$0xf]
        %v732 = vld [vmem:[#allocation4 + $0x3c] sm:$0xf]
        %v733 = vld [vmem:[#allocation4 + $0x40] sm:$0xf]
        %v734 = vld [vmem:[#allocation4 + $0x44] sm:$0xf]
        %v735 = vld [vmem:[#allocation4 + $0x48] sm:$0xf]
        %v736 = vld [vmem:[#allocation4 + $0x4c] sm:$0xf]
        %v737 = vld [vmem:[#allocation4 + $0x50] sm:$0xf]
        %v738 = vld [vmem:[#allocation4 + $0x54] sm:$0xf]
        %v739 = vld [vmem:[#allocation4 + $0x58] sm:$0xf]
        %v740 = vld [vmem:[#allocation4 + $0x5c] sm:$0xf]
        %v741 = vld [vmem:[#allocation4 + $0x60] sm:$0xf]
        %v742 = vld [vmem:[#allocation4 + $0x64] sm:$0xf]
        %v743 = vld [vmem:[#allocation4 + $0x68] sm:$0xf]
        %v744 = vld [vmem:[#allocation4 + $0x6c] sm:$0xf]
        %v745 = vld [vmem:[#allocation4 + $0x70] sm:$0xf]
        %v746 = vld [vmem:[#allocation4 + $0x74] sm:$0xf]
        %v747 = vld [vmem:[#allocation4 + $0x78] sm:$0xf]
        %v748 = vld [vmem:[#allocation4 + $0x7c] sm:$0xf]
        %v781 = vunpack.c.l.b16 %v717
        %v782 = vunpack.c.l.b16 %v718
        %v783 = vunpack.c.l.b16 %v719
        %v784 = vunpack.c.l.b16 %v720
        %v785 = vunpack.c.l.b16 %v721
        %v786 = vunpack.c.l.b16 %v722
        %v787 = vunpack.c.l.b16 %v723
        %v788 = vunpack.c.l.b16 %v724
        %v789 = vunpack.c.l.b16 %v725
        %v790 = vunpack.c.l.b16 %v726
        %v791 = vunpack.c.l.b16 %v727
        %v792 = vunpack.c.l.b16 %v728
        %v793 = vunpack.c.l.b16 %v729
        %v794 = vunpack.c.l.b16 %v730
        %v795 = vunpack.c.l.b16 %v731
        %v796 = vunpack.c.l.b16 %v732
        %v797 = vunpack.c.l.b16 %v733
        %v798 = vunpack.c.l.b16 %v734
        %v799 = vunpack.c.l.b16 %v735
        %v800 = vunpack.c.l.b16 %v736
        %v801 = vunpack.c.l.b16 %v737
        %v802 = vunpack.c.l.b16 %v738
        %v803 = vunpack.c.l.b16 %v739
        %v804 = vunpack.c.l.b16 %v740
        %v805 = vunpack.c.l.b16 %v741
        %v806 = vunpack.c.l.b16 %v742
        %v807 = vunpack.c.l.b16 %v743
        %v808 = vunpack.c.l.b16 %v744
        %v809 = vunpack.c.l.b16 %v745
        %v810 = vunpack.c.l.b16 %v746
        %v811 = vunpack.c.l.b16 %v747
        %v812 = vunpack.c.l.b16 %v748
        %v813 = vpack.c.b16 %v782, %v781
        %v814 = vpack.c.b16 %v784, %v783
        %v815 = vpack.c.b16 %v786, %v785
        %v816 = vpack.c.b16 %v788, %v787
        %v817 = vpack.c.b16 %v790, %v789
        %v818 = vpack.c.b16 %v792, %v791
        %v819 = vpack.c.b16 %v794, %v793
        %v820 = vpack.c.b16 %v796, %v795
        %v821 = vpack.c.b16 %v798, %v797
        %v822 = vpack.c.b16 %v800, %v799
        %v823 = vpack.c.b16 %v802, %v801
        %v824 = vpack.c.b16 %v804, %v803
        %v825 = vpack.c.b16 %v806, %v805
        %v826 = vpack.c.b16 %v808, %v807
        %v827 = vpack.c.b16 %v810, %v809
        %v828 = vpack.c.b16 %v812, %v811
        %845 = vmatprep.subr.bf16.mxu0 0
        %846 = vmatpush1.bf16.msra.mxu0 %v813
        %847 = vmatprep.subr.bf16.mxu0 0
        %848 = vmatpush1.bf16.msra.mxu0 %v814
        %849 = vmatprep.subr.bf16.mxu0 0
        %850 = vmatpush1.bf16.msra.mxu0 %v815
        %851 = vmatprep.subr.bf16.mxu0 0
        %852 = vmatpush1.bf16.msra.mxu0 %v816
        %853 = vmatprep.subr.bf16.mxu0 0
        %854 = vmatpush1.bf16.msra.mxu0 %v817
        %855 = vmatprep.subr.bf16.mxu0 0
        %856 = vmatpush1.bf16.msra.mxu0 %v818
        %857 = vmatprep.subr.bf16.mxu0 0
        %858 = vmatpush1.bf16.msra.mxu0 %v819
        %859 = vmatprep.subr.bf16.mxu0 0
        %860 = vmatpush1.bf16.msra.mxu0 %v820
        %861 = vmatprep.subr.bf16.mxu0 0
        %862 = vmatpush1.bf16.msra.mxu0 %v821
        %863 = vmatprep.subr.bf16.mxu0 0
        %864 = vmatpush1.bf16.msra.mxu0 %v822
        %865 = vmatprep.subr.bf16.mxu0 0
        %866 = vmatpush1.bf16.msra.mxu0 %v823
        %867 = vmatprep.subr.bf16.mxu0 0
        %868 = vmatpush1.bf16.msra.mxu0 %v824
        %869 = vmatprep.subr.bf16.mxu0 0
        %870 = vmatpush1.bf16.msra.mxu0 %v825
        %871 = vmatprep.subr.bf16.mxu0 0
        %872 = vmatpush1.bf16.msra.mxu0 %v826
        %873 = vmatprep.subr.bf16.mxu0 0
        %874 = vmatpush1.bf16.msra.mxu0 %v827
        %875 = vmatprep.subr.bf16.mxu0 0
        %876 = vmatpush1.bf16.msra.mxu0 %v828
        %877 = vmatprep.mubr.bf16.mxu0 %v686
        %878 = vmatmul.mubr.bf16.gmra.mrb[0].mxu0 %v685
        %v879 = vpop.f32.mrb[0].mxu0
        %v880 = vadd.f32 0.0, %v879
        %v881 = vpop.f32.mrb[0].mxu0
        %v882 = vpop.f32.mrb[0].mxu0
        %v883 = vadd.f32 0.0, %v882
        %v884 = vpop.f32.mrb[0].mxu0
        %885 = vmatprep.mubr.bf16.mxu0 %v688
        %886 = vmatmul.mubr.bf16.gmra.mrb[0].mxu0 %v687
        %v887 = vpop.f32.mrb[0].mxu0
        %v888 = vadd.f32 0.0, %v887
        %v889 = vpop.f32.mrb[0].mxu0
        %v890 = vpop.f32.mrb[0].mxu0
        %v891 = vadd.f32 0.0, %v890
        %v892 = vpop.f32.mrb[0].mxu0
        %893 = vmatprep.mubr.bf16.mxu0 %v690
        %894 = vmatmul.mubr.bf16.gmra.mrb[0].mxu0 %v689
        %v895 = vpop.f32.mrb[0].mxu0
        %v896 = vadd.f32 0.0, %v895
        %v897 = vpop.f32.mrb[0].mxu0
        %v898 = vpop.f32.mrb[0].mxu0
        %v899 = vadd.f32 0.0, %v898
        %v900 = vpop.f32.mrb[0].mxu0
        %901 = vmatprep.mubr.bf16.mxu0 %v692
        %902 = vmatmul.mubr.bf16.gmra.mrb[0].mxu0 %v691
        %v903 = vpop.f32.mrb[0].mxu0
        %v904 = vadd.f32 0.0, %v903
        %v905 = vpop.f32.mrb[0].mxu0
        %v906 = vpop.f32.mrb[0].mxu0
        %v907 = vadd.f32 0.0, %v906
        %v908 = vpop.f32.mrb[0].mxu0
        %909 = vmatprep.mubr.bf16.mxu0 %v694
        %910 = vmatmul.mubr.bf16.gmra.mrb[0].mxu0 %v693
        %v911 = vpop.f32.mrb[0].mxu0
        %v912 = vadd.f32 0.0, %v911
        %v913 = vpop.f32.mrb[0].mxu0
        %v914 = vpop.f32.mrb[0].mxu0
        %v915 = vadd.f32 0.0, %v914
        %v916 = vpop.f32.mrb[0].mxu0
        %917 = vmatprep.mubr.bf16.mxu0 %v696
        %918 = vmatmul.mubr.bf16.gmra.mrb[0].mxu0 %v695
        %v919 = vpop.f32.mrb[0].mxu0
        %v920 = vadd.f32 0.0, %v919
        %v921 = vpop.f32.mrb[0].mxu0
        %v922 = vpop.f32.mrb[0].mxu0
        %v923 = vadd.f32 0.0, %v922
        %v924 = vpop.f32.mrb[0].mxu0
        %925 = vmatprep.mubr.bf16.mxu0 %v698
        %926 = vmatmul.mubr.bf16.gmra.mrb[0].mxu0 %v697
        %v927 = vpop.f32.mrb[0].mxu0
        %v928 = vadd.f32 0.0, %v927
        %v929 = vpop.f32.mrb[0].mxu0
        %v930 = vpop.f32.mrb[0].mxu0
        %v931 = vadd.f32 0.0, %v930
        %v932 = vpop.f32.mrb[0].mxu0
        %933 = vmatprep.mubr.bf16.mxu0 %v700
        %934 = vmatmul.mubr.bf16.gmra.mrb[0].mxu0 %v699
        %v935 = vpop.f32.mrb[0].mxu0
        %v936 = vadd.f32 0.0, %v935
        %v937 = vpop.f32.mrb[0].mxu0
        %v938 = vpop.f32.mrb[0].mxu0
        %v939 = vadd.f32 0.0, %v938
        %v940 = vpop.f32.mrb[0].mxu0
        %941 = vmatprep.mubr.bf16.mxu0 %v702
        %942 = vmatmul.mubr.bf16.gmra.mrb[0].mxu0 %v701
        %v943 = vpop.f32.mrb[0].mxu0
        %v944 = vadd.f32 0.0, %v943
        %v945 = vpop.f32.mrb[0].mxu0
        %v946 = vpop.f32.mrb[0].mxu0
        %v947 = vadd.f32 0.0, %v946
        %v948 = vpop.f32.mrb[0].mxu0
        %949 = vmatprep.mubr.bf16.mxu0 %v704
        %950 = vmatmul.mubr.bf16.gmra.mrb[0].mxu0 %v703
        %v951 = vpop.f32.mrb[0].mxu0
        %v952 = vadd.f32 0.0, %v951
        %v953 = vpop.f32.mrb[0].mxu0
        %v954 = vpop.f32.mrb[0].mxu0
        %v955 = vadd.f32 0.0, %v954
        %v956 = vpop.f32.mrb[0].mxu0
        %957 = vmatprep.mubr.bf16.mxu0 %v706
        %958 = vmatmul.mubr.bf16.gmra.mrb[0].mxu0 %v705
        %v959 = vpop.f32.mrb[0].mxu0
        %v960 = vadd.f32 0.0, %v959
        %v961 = vpop.f32.mrb[0].mxu0
        %v962 = vpop.f32.mrb[0].mxu0
        %v963 = vadd.f32 0.0, %v962
        %v964 = vpop.f32.mrb[0].mxu0
        %965 = vmatprep.mubr.bf16.mxu0 %v708
        %966 = vmatmul.mubr.bf16.gmra.mrb[0].mxu0 %v707
        %v967 = vpop.f32.mrb[0].mxu0
        %v968 = vadd.f32 0.0, %v967
        %v969 = vpop.f32.mrb[0].mxu0
        %v970 = vpop.f32.mrb[0].mxu0
        %v971 = vadd.f32 0.0, %v970
        %v972 = vpop.f32.mrb[0].mxu0
        %973 = vmatprep.mubr.bf16.mxu0 %v710
        %974 = vmatmul.mubr.bf16.gmra.mrb[0].mxu0 %v709
        %v975 = vpop.f32.mrb[0].mxu0
        %v976 = vadd.f32 0.0, %v975
        %v977 = vpop.f32.mrb[0].mxu0
        %v978 = vpop.f32.mrb[0].mxu0
        %v979 = vadd.f32 0.0, %v978
        %v980 = vpop.f32.mrb[0].mxu0
        %981 = vmatprep.mubr.bf16.mxu0 %v712
        %982 = vmatmul.mubr.bf16.gmra.mrb[0].mxu0 %v711
        %v983 = vpop.f32.mrb[0].mxu0
        %v984 = vadd.f32 0.0, %v983
        %v985 = vpop.f32.mrb[0].mxu0
        %v986 = vpop.f32.mrb[0].mxu0
        %v987 = vadd.f32 0.0, %v986
        %v988 = vpop.f32.mrb[0].mxu0
        %989 = vmatprep.mubr.bf16.mxu0 %v714
        %990 = vmatmul.mubr.bf16.gmra.mrb[0].mxu0 %v713
        %v991 = vpop.f32.mrb[0].mxu0
        %v992 = vadd.f32 0.0, %v991
        %v993 = vpop.f32.mrb[0].mxu0
        %v994 = vpop.f32.mrb[0].mxu0
        %v995 = vadd.f32 0.0, %v994
        %v996 = vpop.f32.mrb[0].mxu0
        %997 = vmatprep.mubr.bf16.mxu0 %v716
        %998 = vmatmul.mubr.bf16.gmra.mrb[0].mxu0 %v715
        %v999 = vpop.f32.mrb[0].mxu0
        %v1000 = vadd.f32 0.0, %v999
        %v1001 = vpop.f32.mrb[0].mxu0
        %v1002 = vpop.f32.mrb[0].mxu0
        %v1003 = vadd.f32 0.0, %v1002
        %v1004 = vpop.f32.mrb[0].mxu0
        %1005 = vdwg.mxu0
        %v1006 = vadd.f32 %v653, %v880
        %v1007 = vadd.f32 %v654, %v883
        %v1008 = vadd.f32 %v655, %v888
        %v1009 = vadd.f32 %v656, %v891
        %v1010 = vadd.f32 %v657, %v896
        %v1011 = vadd.f32 %v658, %v899
        %v1012 = vadd.f32 %v659, %v904
        %v1013 = vadd.f32 %v660, %v907
        %v1014 = vadd.f32 %v661, %v912
        %v1015 = vadd.f32 %v662, %v915
        %v1016 = vadd.f32 %v663, %v920
        %v1017 = vadd.f32 %v664, %v923
        %v1018 = vadd.f32 %v665, %v928
        %v1019 = vadd.f32 %v666, %v931
        %v1020 = vadd.f32 %v667, %v936
        %v1021 = vadd.f32 %v668, %v939
        %v1022 = vadd.f32 %v669, %v944
        %v1023 = vadd.f32 %v670, %v947
        %v1024 = vadd.f32 %v671, %v952
        %v1025 = vadd.f32 %v672, %v955
        %v1026 = vadd.f32 %v673, %v960
        %v1027 = vadd.f32 %v674, %v963
        %v1028 = vadd.f32 %v675, %v968
        %v1029 = vadd.f32 %v676, %v971
        %v1030 = vadd.f32 %v677, %v976
        %v1031 = vadd.f32 %v678, %v979
        %v1032 = vadd.f32 %v679, %v984
        %v1033 = vadd.f32 %v680, %v987
        %v1034 = vadd.f32 %v681, %v992
        %v1035 = vadd.f32 %v682, %v995
        %v1036 = vadd.f32 %v683, %v1000
        %v1037 = vadd.f32 %v684, %v1003
        %1038 = vst [vmem:[%s398] sm:$0xff] %v1006
        %1039 = vst [vmem:[%s398 + $0x8] sm:$0xff] %v1007
        %1040 = vst [vmem:[%s398 + $0x10] sm:$0xff] %v1008
        %1041 = vst [vmem:[%s398 + $0x18] sm:$0xff] %v1009
        %1042 = vst [vmem:[%s398 + $0x20] sm:$0xff] %v1010
        %1043 = vst [vmem:[%s398 + $0x28] sm:$0xff] %v1011
        %1044 = vst [vmem:[%s398 + $0x30] sm:$0xff] %v1012
        %1045 = vst [vmem:[%s398 + $0x38] sm:$0xff] %v1013
        %1046 = vst [vmem:[%s398 + $0x40] sm:$0xff] %v1014
        %1047 = vst [vmem:[%s398 + $0x48] sm:$0xff] %v1015
        %1048 = vst [vmem:[%s398 + $0x50] sm:$0xff] %v1016
        %1049 = vst [vmem:[%s398 + $0x58] sm:$0xff] %v1017
        %1050 = vst [vmem:[%s398 + $0x60] sm:$0xff] %v1018
        %1051 = vst [vmem:[%s398 + $0x68] sm:$0xff] %v1019
        %1052 = vst [vmem:[%s398 + $0x70] sm:$0xff] %v1020
        %1053 = vst [vmem:[%s398 + $0x78] sm:$0xff] %v1021
        %1054 = vst [vmem:[%s398 + $0x80] sm:$0xff] %v1022
        %1055 = vst [vmem:[%s398 + $0x88] sm:$0xff] %v1023
        %1056 = vst [vmem:[%s398 + $0x90] sm:$0xff] %v1024
        %1057 = vst [vmem:[%s398 + $0x98] sm:$0xff] %v1025
        %1058 = vst [vmem:[%s398 + $0xa0] sm:$0xff] %v1026
        %1059 = vst [vmem:[%s398 + $0xa8] sm:$0xff] %v1027
        %1060 = vst [vmem:[%s398 + $0xb0] sm:$0xff] %v1028
        %1061 = vst [vmem:[%s398 + $0xb8] sm:$0xff] %v1029
        %1062 = vst [vmem:[%s398 + $0xc0] sm:$0xff] %v1030
        %1063 = vst [vmem:[%s398 + $0xc8] sm:$0xff] %v1031
        %1064 = vst [vmem:[%s398 + $0xd0] sm:$0xff] %v1032
        %1065 = vst [vmem:[%s398 + $0xd8] sm:$0xff] %v1033
        %1066 = vst [vmem:[%s398 + $0xe0] sm:$0xff] %v1034
        %1067 = vst [vmem:[%s398 + $0xe8] sm:$0xff] %v1035
        %1068 = vst [vmem:[%s398 + $0xf0] sm:$0xff] %v1036
        %1069 = vst [vmem:[%s398 + $0xf8] sm:$0xff] %v1037
        // Predicated region
        $region57: #{fused_matmul.1} parent=43 // pred_check
          %p1070 = pneg %p401
        $region58: #{fused_matmul.1} parent=43 // pred_check_branch
          %1072 = sbr.rel (%p1070) target = $region60
        $region59: #{fused_matmul.1} parent=43 // pred_region
          %v1073 = vld [vmem:[%s398] sm:$0xff]
          %v1074 = vld [vmem:[%s398 + $0x8] sm:$0xff]
          %v1075 = vld [vmem:[%s398 + $0x10] sm:$0xff]
          %v1076 = vld [vmem:[%s398 + $0x18] sm:$0xff]
          %v1077 = vld [vmem:[%s398 + $0x20] sm:$0xff]
          %v1078 = vld [vmem:[%s398 + $0x28] sm:$0xff]
          %v1079 = vld [vmem:[%s398 + $0x30] sm:$0xff]
          %v1080 = vld [vmem:[%s398 + $0x38] sm:$0xff]
          %v1081 = vld [vmem:[%s398 + $0x40] sm:$0xff]
          %v1082 = vld [vmem:[%s398 + $0x48] sm:$0xff]
          %v1083 = vld [vmem:[%s398 + $0x50] sm:$0xff]
          %v1084 = vld [vmem:[%s398 + $0x58] sm:$0xff]
          %v1085 = vld [vmem:[%s398 + $0x60] sm:$0xff]
          %v1086 = vld [vmem:[%s398 + $0x68] sm:$0xff]
          %v1087 = vld [vmem:[%s398 + $0x70] sm:$0xff]
          %v1088 = vld [vmem:[%s398 + $0x78] sm:$0xff]
          %v1089 = vld [vmem:[%s398 + $0x80] sm:$0xff]
          %v1090 = vld [vmem:[%s398 + $0x88] sm:$0xff]
          %v1091 = vld [vmem:[%s398 + $0x90] sm:$0xff]
          %v1092 = vld [vmem:[%s398 + $0x98] sm:$0xff]
          %v1093 = vld [vmem:[%s398 + $0xa0] sm:$0xff]
          %v1094 = vld [vmem:[%s398 + $0xa8] sm:$0xff]
          %v1095 = vld [vmem:[%s398 + $0xb0] sm:$0xff]
          %v1096 = vld [vmem:[%s398 + $0xb8] sm:$0xff]
          %v1097 = vld [vmem:[%s398 + $0xc0] sm:$0xff]
          %v1098 = vld [vmem:[%s398 + $0xc8] sm:$0xff]
          %v1099 = vld [vmem:[%s398 + $0xd0] sm:$0xff]
          %v1100 = vld [vmem:[%s398 + $0xd8] sm:$0xff]
          %v1101 = vld [vmem:[%s398 + $0xe0] sm:$0xff]
          %v1102 = vld [vmem:[%s398 + $0xe8] sm:$0xff]
          %v1103 = vld [vmem:[%s398 + $0xf0] sm:$0xff]
          %v1104 = vld [vmem:[%s398 + $0xf8] sm:$0xff]
          %v1105 = vld [vmem:[%s387] sm:$0x1]
          %v1107 = vlaneseq
          %v1108 = vshrl.u32 %v1107, 7
          %v1109 = vsub.s32 0, %v1108
          %v1110 = vrot.slane %v1105, %v1109
          %v1112 = vmul.f32 %v1073, %v1110
          %v1113 = vmul.f32 %v1074, %v1110
          %v1114 = vmul.f32 %v1075, %v1110
          %v1115 = vmul.f32 %v1076, %v1110
          %v1116 = vmul.f32 %v1077, %v1110
          %v1117 = vmul.f32 %v1078, %v1110
          %v1118 = vmul.f32 %v1079, %v1110
          %v1119 = vmul.f32 %v1080, %v1110
          %v1120 = vmul.f32 %v1081, %v1110
          %v1121 = vmul.f32 %v1082, %v1110
          %v1122 = vmul.f32 %v1083, %v1110
          %v1123 = vmul.f32 %v1084, %v1110
          %v1124 = vmul.f32 %v1085, %v1110
          %v1125 = vmul.f32 %v1086, %v1110
          %v1126 = vmul.f32 %v1087, %v1110
          %v1127 = vmul.f32 %v1088, %v1110
          %v1128 = vmul.f32 %v1089, %v1110
          %v1129 = vmul.f32 %v1090, %v1110
          %v1130 = vmul.f32 %v1091, %v1110
          %v1131 = vmul.f32 %v1092, %v1110
          %v1132 = vmul.f32 %v1093, %v1110
          %v1133 = vmul.f32 %v1094, %v1110
          %v1134 = vmul.f32 %v1095, %v1110
          %v1135 = vmul.f32 %v1096, %v1110
          %v1136 = vmul.f32 %v1097, %v1110
          %v1137 = vmul.f32 %v1098, %v1110
          %v1138 = vmul.f32 %v1099, %v1110
          %v1139 = vmul.f32 %v1100, %v1110
          %v1140 = vmul.f32 %v1101, %v1110
          %v1141 = vmul.f32 %v1102, %v1110
          %v1142 = vmul.f32 %v1103, %v1110
          %v1143 = vmul.f32 %v1104, %v1110
          %v1144 = vld [vmem:[%s390] sm:$0x1]
          %v1146 = vlaneseq
          %v1147 = vshrl.u32 %v1146, 7
          %v1148 = vsub.s32 0, %v1147
          %v1149 = vrot.slane %v1144, %v1148
          %v1151 = vadd.f32 %v1112, %v1149
          %v1152 = vadd.f32 %v1113, %v1149
          %v1153 = vadd.f32 %v1114, %v1149
          %v1154 = vadd.f32 %v1115, %v1149
          %v1155 = vadd.f32 %v1116, %v1149
          %v1156 = vadd.f32 %v1117, %v1149
          %v1157 = vadd.f32 %v1118, %v1149
          %v1158 = vadd.f32 %v1119, %v1149
          %v1159 = vadd.f32 %v1120, %v1149
          %v1160 = vadd.f32 %v1121, %v1149
          %v1161 = vadd.f32 %v1122, %v1149
          %v1162 = vadd.f32 %v1123, %v1149
          %v1163 = vadd.f32 %v1124, %v1149
          %v1164 = vadd.f32 %v1125, %v1149
          %v1165 = vadd.f32 %v1126, %v1149
          %v1166 = vadd.f32 %v1127, %v1149
          %v1167 = vadd.f32 %v1128, %v1149
          %v1168 = vadd.f32 %v1129, %v1149
          %v1169 = vadd.f32 %v1130, %v1149
          %v1170 = vadd.f32 %v1131, %v1149
          %v1171 = vadd.f32 %v1132, %v1149
          %v1172 = vadd.f32 %v1133, %v1149
          %v1173 = vadd.f32 %v1134, %v1149
          %v1174 = vadd.f32 %v1135, %v1149
          %v1175 = vadd.f32 %v1136, %v1149
          %v1176 = vadd.f32 %v1137, %v1149
          %v1177 = vadd.f32 %v1138, %v1149
          %v1178 = vadd.f32 %v1139, %v1149
          %v1179 = vadd.f32 %v1140, %v1149
          %v1180 = vadd.f32 %v1141, %v1149
          %v1181 = vadd.f32 %v1142, %v1149
          %v1182 = vadd.f32 %v1143, %v1149
          %v1183 = vmax.f32 %v1151, 0.0
          %v1184 = vmax.f32 %v1152, 0.0
          %v1185 = vmax.f32 %v1153, 0.0
          %v1186 = vmax.f32 %v1154, 0.0
          %v1187 = vmax.f32 %v1155, 0.0
          %v1188 = vmax.f32 %v1156, 0.0
          %v1189 = vmax.f32 %v1157, 0.0
          %v1190 = vmax.f32 %v1158, 0.0
          %v1191 = vmax.f32 %v1159, 0.0
          %v1192 = vmax.f32 %v1160, 0.0
          %v1193 = vmax.f32 %v1161, 0.0
          %v1194 = vmax.f32 %v1162, 0.0
          %v1195 = vmax.f32 %v1163, 0.0
          %v1196 = vmax.f32 %v1164, 0.0
          %v1197 = vmax.f32 %v1165, 0.0
          %v1198 = vmax.f32 %v1166, 0.0
          %v1199 = vmax.f32 %v1167, 0.0
          %v1200 = vmax.f32 %v1168, 0.0
          %v1201 = vmax.f32 %v1169, 0.0
          %v1202 = vmax.f32 %v1170, 0.0
          %v1203 = vmax.f32 %v1171, 0.0
          %v1204 = vmax.f32 %v1172, 0.0
          %v1205 = vmax.f32 %v1173, 0.0
          %v1206 = vmax.f32 %v1174, 0.0
          %v1207 = vmax.f32 %v1175, 0.0
          %v1208 = vmax.f32 %v1176, 0.0
          %v1209 = vmax.f32 %v1177, 0.0
          %v1210 = vmax.f32 %v1178, 0.0
          %v1211 = vmax.f32 %v1179, 0.0
          %v1212 = vmax.f32 %v1180, 0.0
          %v1213 = vmax.f32 %v1181, 0.0
          %v1214 = vmax.f32 %v1182, 0.0
          %1215 = vst [vmem:[%s398] sm:$0xff] %v1183
          %1216 = vst [vmem:[%s398 + $0x8] sm:$0xff] %v1184
          %1217 = vst [vmem:[%s398 + $0x10] sm:$0xff] %v1185
          %1218 = vst [vmem:[%s398 + $0x18] sm:$0xff] %v1186
          %1219 = vst [vmem:[%s398 + $0x20] sm:$0xff] %v1187
          %1220 = vst [vmem:[%s398 + $0x28] sm:$0xff] %v1188
          %1221 = vst [vmem:[%s398 + $0x30] sm:$0xff] %v1189
          %1222 = vst [vmem:[%s398 + $0x38] sm:$0xff] %v1190
          %1223 = vst [vmem:[%s398 + $0x40] sm:$0xff] %v1191
          %1224 = vst [vmem:[%s398 + $0x48] sm:$0xff] %v1192
          %1225 = vst [vmem:[%s398 + $0x50] sm:$0xff] %v1193
          %1226 = vst [vmem:[%s398 + $0x58] sm:$0xff] %v1194
          %1227 = vst [vmem:[%s398 + $0x60] sm:$0xff] %v1195
          %1228 = vst [vmem:[%s398 + $0x68] sm:$0xff] %v1196
          %1229 = vst [vmem:[%s398 + $0x70] sm:$0xff] %v1197
          %1230 = vst [vmem:[%s398 + $0x78] sm:$0xff] %v1198
          %1231 = vst [vmem:[%s398 + $0x80] sm:$0xff] %v1199
          %1232 = vst [vmem:[%s398 + $0x88] sm:$0xff] %v1200
          %1233 = vst [vmem:[%s398 + $0x90] sm:$0xff] %v1201
          %1234 = vst [vmem:[%s398 + $0x98] sm:$0xff] %v1202
          %1235 = vst [vmem:[%s398 + $0xa0] sm:$0xff] %v1203
          %1236 = vst [vmem:[%s398 + $0xa8] sm:$0xff] %v1204
          %1237 = vst [vmem:[%s398 + $0xb0] sm:$0xff] %v1205
          %1238 = vst [vmem:[%s398 + $0xb8] sm:$0xff] %v1206
          %1239 = vst [vmem:[%s398 + $0xc0] sm:$0xff] %v1207
          %1240 = vst [vmem:[%s398 + $0xc8] sm:$0xff] %v1208
          %1241 = vst [vmem:[%s398 + $0xd0] sm:$0xff] %v1209
          %1242 = vst [vmem:[%s398 + $0xd8] sm:$0xff] %v1210
          %1243 = vst [vmem:[%s398 + $0xe0] sm:$0xff] %v1211
          %1244 = vst [vmem:[%s398 + $0xe8] sm:$0xff] %v1212
          %1245 = vst [vmem:[%s398 + $0xf0] sm:$0xff] %v1213
          %1246 = vst [vmem:[%s398 + $0xf8] sm:$0xff] %v1214
        $region60: #{fused_matmul.1} parent=43 // pred_fallthru
          _
        %s1247 = smul.u32 32, %s26
        %p1248 = scmp.lt.s32.totalorder %s1247, 63
        %s1249 = scalar_select %p1248, %s1247, 63
        %p1250 = scmp.lt.s32.totalorder %s27, 0
        %s1251 = scalar_select %p1250, %s27, 0
        %s1252 = sadd.s32 %s1251, %s1249
        %s1253 = smul.addr %s1252, 8
        %s1254 = scalar_lea.vmem %s6, %s1253
        // Predicated region
        $region61: #{fused_matmul.1} parent=43 // pred_check
          %p1255 = pneg %p220
        $region62: #{fused_matmul.1} parent=43 // pred_check_branch
          %1257 = sbr.rel (%p1255) target = $region64
        $region63: #{fused_matmul.1} parent=43 // pred_region
          %s1258 = smul.u32 32, %s26
        $region64: #{fused_matmul.1} parent=43 // pred_fallthru
          _
      $region44: #{fused_matmul.1} parent=5 // pred_fallthru
        _
      %p1259 = scmp.le.s32.totalorder 2, %s16
      // Predicated region
      $region65: #{fused_matmul.1} parent=5 // pred_check
        %p1260 = pneg %p1259
      $region66: #{fused_matmul.1} parent=5 // pred_check_branch
        %1262 = sbr.rel (%p1260) target = $region68
      $region67: #{fused_matmul.1} parent=5 // pred_region
        %s1263 = ssub.s32 %s16, 2
        // Predicated region
        $region69: #{fused_matmul.1} parent=67 // pred_check
          %p1264 = pneg %p226
        $region70: #{fused_matmul.1} parent=67 // pred_check_branch
          %1266 = sbr.rel (%p1264) target = $region72
        $region71: #{fused_matmul.1} parent=67 // pred_region
          %s1267 = smul.u32 32, %s29
          %p1268 = scmp.lt.s32.totalorder %s1267, 63
          %s1269 = scalar_select %p1268, %s1267, 63
          %p1270 = scmp.lt.s32.totalorder %s30, 0
          %s1271 = scalar_select %p1270, %s30, 0
          %s1272 = sadd.s32 %s1271, %s1269
          %s1273 = smul.addr %s1272, 8
          %s1274 = scalar_lea.vmem %s6, %s1273
        $region72: #{fused_matmul.1} parent=67 // pred_fallthru
          _
      $region68: #{fused_matmul.1} parent=5 // pred_fallthru
        _
    $region6: #{fused_matmul.1} parent=1 // loop_footer
      %s20 = sadd.s32 1, %s16
    $region7: #{fused_matmul.1} parent=1 // loop_footer_branch
      %15 = sbr.rel target = $region3
    $region8: #{fused_matmul.1} parent=1 // loop_exit
      _
    %1275 = vsyncpa [#allocation3], 1
    %s1276 = scalar_lea.sflag [#allocation3], 1
    %1277 = vsyncpa %s1276, 1
    %1278 = vsyncpa [#allocation5], 1

</llo_original>
